<compile_context>
chip_gen: v7x
topology: tpu7x:2x2x1
jax: 0.10.0
libtpu: 0.0.40
codegen_flags: <defaults>
</compile_context>

<pallas_src>
import functools

import jax
import jax.numpy as jnp
from jax.experimental import pallas as pl
from jax.experimental.pallas import tpu as pltpu


def _bigru_kernel(gx_ref, whh_f_ref, whh_b_ref, bhn_f_ref, bhn_b_ref,
                  out_f_ref, out_b_ref, *, hidden_size):
    """Single-invocation bidirectional GRU recurrence (input proj. pre-hoisted).

    gx_ref     : (S, B, 6H)  precomputed x @ [W_ih_f^T | W_ih_b^T] + biases
                 (r/z gate columns already include b_ih + b_hh; n gate columns
                  include b_ih only)
    whh_*_ref  : (H, 3H)     hidden->hidden weights per direction (transposed)
    bhn_*_ref  : (1, H)      b_hh for the n gate per direction
    out_f_ref  : (S, B, H)   forward per-timestep hidden states
    out_b_ref  : (S, B, H)   backward per-timestep hidden states (natural time
                             order: out_b[t] = bwd state after seeing x_{S-1..t})
    """
    S, B, _ = gx_ref.shape
    H = hidden_size

    # Hoist weight loads / bias broadcasts out of the recurrence.
    whh_f = whh_f_ref[...]
    whh_b = whh_b_ref[...]
    bhn_f = jnp.broadcast_to(bhn_f_ref[...], (B, H))
    bhn_b = jnp.broadcast_to(bhn_b_ref[...], (B, H))

    h0 = jnp.zeros((B, H), jnp.float32)

    def step(t, carry):
        hf, hb = carry
        rt = S - 1 - t

        g_f = gx_ref[t]      # (B, 6H): cols [r_f z_f n_f r_b z_b n_b]
        g_b = gx_ref[rt]

        # Two independent small MXU dots -> scheduler interleaves fwd/bwd work.
        ghf = jnp.dot(hf, whh_f, preferred_element_type=jnp.float32)
        ghb = jnp.dot(hb, whh_b, preferred_element_type=jnp.float32)

        # Forward direction (PyTorch gate order r, z, n).
        rf = jax.nn.sigmoid(g_f[:, 0:H] + ghf[:, 0:H])
        zf = jax.nn.sigmoid(g_f[:, H:2 * H] + ghf[:, H:2 * H])
        nf = jnp.tanh(g_f[:, 2 * H:3 * H] + rf * (ghf[:, 2 * H:3 * H] + bhn_f))
        hf_new = (1.0 - zf) * nf + zf * hf

        # Backward direction (reads timestep S-1-t, writes the same row).
        rb = jax.nn.sigmoid(g_b[:, 3 * H:4 * H] + ghb[:, 0:H])
        zb = jax.nn.sigmoid(g_b[:, 4 * H:5 * H] + ghb[:, H:2 * H])
        nb = jnp.tanh(g_b[:, 5 * H:6 * H] + rb * (ghb[:, 2 * H:3 * H] + bhn_b))
        hb_new = (1.0 - zb) * nb + zb * hb

        out_f_ref[t] = hf_new
        out_b_ref[rt] = hb_new
        return (hf_new, hb_new)

    jax.lax.fori_loop(0, S, step, (h0, h0), unroll=True)


def _bigru_forward(x_bse, w_ih_cat, b_cat, w_hh_f_t, w_hh_b_t, b_hn_f, b_hn_b):
    """x_bse (B,S,E) -> (output (B,S,2H), h_n (2,B,H)), nn.GRU semantics."""
    B, S, E = x_bse.shape
    H = w_hh_f_t.shape[0]

    x_sbe = jnp.transpose(x_bse, (1, 0, 2))            # (S, B, E)

    # Pad batch up to a multiple of 8 sublanes (padded rows are discarded).
    Bp = ((B + 7) // 8) * 8
    if Bp != B:
        x_sbe = jnp.pad(x_sbe, ((0, 0), (0, Bp - B), (0, 0)))

    # Hoisted input projection: ONE big matmul for the whole sequence and both
    # directions (M = S*Bp rows) instead of S tiny per-step matmuls.
    gx = jnp.dot(x_sbe.reshape(S * Bp, E), w_ih_cat,
                 preferred_element_type=jnp.float32) + b_cat
    gx = gx.reshape(S, Bp, 6 * H)

    kernel = functools.partial(_bigru_kernel, hidden_size=H)
    out_f, out_b = pl.pallas_call(
        kernel,
        out_shape=(jax.ShapeDtypeStruct((S, Bp, H), jnp.float32),
                   jax.ShapeDtypeStruct((S, Bp, H), jnp.float32)),
        in_specs=[pl.BlockSpec(memory_space=pltpu.MemorySpace.VMEM)] * 5,
        out_specs=(pl.BlockSpec(memory_space=pltpu.MemorySpace.VMEM),
                   pl.BlockSpec(memory_space=pltpu.MemorySpace.VMEM)),
    )(gx, w_hh_f_t, w_hh_b_t, b_hn_f, b_hn_b)

    out_f = out_f[:, :B]                                # (S, B, H)
    out_b = out_b[:, :B]

    output = jnp.concatenate([out_f, out_b], axis=-1)   # (S, B, 2H)
    output = jnp.transpose(output, (1, 0, 2))           # (B, S, 2H) batch_first
    h_n = jnp.stack([out_f[-1], out_b[0]], axis=0)      # (2, B, H)
    return output, h_n


_bigru_forward_jit = jax.jit(_bigru_forward)


class BaseRNNPallas:
    """Bidirectional 1-layer GRU (batch_first) matching nn.GRU semantics."""

    def __init__(self, vocab_size, embedding_size, hidden_size, max_length,
                 dropout=0.2, n_layers=1, bidirectional=True, key=None):
        assert n_layers == 1 and bidirectional
        self.vocab_size = vocab_size
        self.embedding_size = embedding_size
        self.hidden_size = hidden_size
        self.max_length = max_length

        if key is None:
            key = jax.random.PRNGKey(0)
        k = 1.0 / jnp.sqrt(hidden_size)
        keys = jax.random.split(key, 8)

        def u(kk, shape):
            return jax.random.uniform(kk, shape, jnp.float32, -k, k)

        E, H = embedding_size, hidden_size
        # Raw PyTorch parameter layout: weight_ih (3H,E), weight_hh (3H,H), biases (3H,)
        self.params = {}
        for d, base in enumerate(["fwd", "bwd"]):
            self.params[base] = dict(
                w_ih=u(keys[4 * d + 0], (3 * H, E)),
                w_hh=u(keys[4 * d + 1], (3 * H, H)),
                b_ih=u(keys[4 * d + 2], (3 * H,)),
                b_hh=u(keys[4 * d + 3], (3 * H,)),
            )

        # Precompute kernel-friendly forms ONCE (no per-call transposes):
        #   w_ih_cat : (E, 6H)  columns [r_f z_f n_f r_b z_b n_b]
        #   b_cat    : (6H,)    r/z gates carry b_ih + b_hh folded in; n gate b_ih only
        #   w_hh_*_t : (H, 3H)
        #   b_hn_*   : (1, H)   b_hh for the n gate (added inside r * (gh_n + b_hn))
        def prep(p):
            w_ih_t = jnp.transpose(p["w_ih"])                  # (E, 3H)
            w_hh_t = jnp.transpose(p["w_hh"])                  # (H, 3H)
            b_comb = jnp.concatenate(
                [p["b_ih"][:2 * H] + p["b_hh"][:2 * H], p["b_ih"][2 * H:]])
            b_hn = p["b_hh"][2 * H:].reshape(1, H)
            return w_ih_t, w_hh_t, b_comb, b_hn

        wif, whf, bcf, bhnf = prep(self.params["fwd"])
        wib, whb, bcb, bhnb = prep(self.params["bwd"])
        self.w_ih_cat = jnp.concatenate([wif, wib], axis=1)    # (E, 6H)
        self.b_cat = jnp.concatenate([bcf, bcb])                # (6H,)
        self.w_hh_f_t = whf
        self.w_hh_b_t = whb
        self.b_hn_f = bhnf
        self.b_hn_b = bhnb

    def __call__(self, x_bse):
        """x_bse: (B, S, E) float32 -> (output (B, S, 2H), h_n (2, B, H))."""
        return _bigru_forward_jit(x_bse, self.w_ih_cat, self.b_cat,
                                  self.w_hh_f_t, self.w_hh_b_t,
                                  self.b_hn_f, self.b_hn_b)


def _gru_reference(x_bse, params, hidden_size):
    """Pure-JAX reference (lax.scan) matching nn.GRU semantics."""
    H = hidden_size

    def cell(p, h, x_t):
        gx = x_t @ p["w_ih"].T + p["b_ih"]
        gh = h @ p["w_hh"].T + p["b_hh"]
        r = jax.nn.sigmoid(gx[:, :H] + gh[:, :H])
        z = jax.nn.sigmoid(gx[:, H:2 * H] + gh[:, H:2 * H])
        n = jnp.tanh(gx[:, 2 * H:] + r * gh[:, 2 * H:])
        return (1.0 - z) * n + z * h

    x_sbe = jnp.transpose(x_bse, (1, 0, 2))
    B = x_bse.shape[0]
    h0 = jnp.zeros((B, H), jnp.float32)

    def run(p, xs):
        def step(h, x_t):
            h = cell(p, h, x_t)
            return h, h
        hn, out = jax.lax.scan(step, h0, xs)
        return out, hn

    out_f, hn_f = run(params["fwd"], x_sbe)
    out_b, hn_b = run(params["bwd"], x_sbe[::-1])
    out_b = out_b[::-1]
    output = jnp.transpose(jnp.concatenate([out_f, out_b], -1), (1, 0, 2))
    return output, jnp.stack([hn_f, hn_b], 0)


if __name__ == "__main__":
    # Small shapes consistent with the module: batch=2, seq=max_length=8,
    # embedding_size=16, hidden_size=32, vocab_size=100.
    B, S, E, H = 2, 8, 16, 32
    model = BaseRNNPallas(vocab_size=100, embedding_size=E, hidden_size=H,
                          max_length=S, key=jax.random.PRNGKey(0))

    x = jax.random.normal(jax.random.PRNGKey(1), (B, S, E), jnp.float32)

    output, h_n = model(x)
    output = jax.block_until_ready(output)
    h_n = jax.block_until_ready(h_n)

    # Sanity check against a pure-JAX reference.
    ref_out, ref_hn = _gru_reference(x, model.params, H)
    assert output.shape == (B, S, 2 * H)
    assert h_n.shape == (2, B, H)
    assert jnp.allclose(output, ref_out, atol=1e-5, rtol=1e-5)
    assert jnp.allclose(h_n, ref_hn, atol=1e-5, rtol=1e-5)

    print("KERNEL_OK")
</pallas_src>

<mosaic_0001>
module attributes {stable_mosaic.version = 11 : i64} {
  func.func @_bigru_kernel(%arg0: memref<8x8x192xf32, #tpu.memory_space<vmem>>, %arg1: memref<32x96xf32, #tpu.memory_space<vmem>>, %arg2: memref<32x96xf32, #tpu.memory_space<vmem>>, %arg3: memref<1x32xf32, #tpu.memory_space<vmem>>, %arg4: memref<1x32xf32, #tpu.memory_space<vmem>>, %arg5: memref<8x8x32xf32, #tpu.memory_space<vmem>>, %arg6: memref<8x8x32xf32, #tpu.memory_space<vmem>>) attributes {dimension_semantics = [], scalar_prefetch = 0 : i64, scratch_operands = 0 : i64, tpu.core_type = #tpu.core_type<tc>} {
    %c0 = arith.constant 0 : index
    %c0_0 = arith.constant 0 : index
    %0 = vector.load %arg1[%c0, %c0_0] : memref<32x96xf32, #tpu.memory_space<vmem>>, vector<32x96xf32>
    %c0_1 = arith.constant 0 : index
    %c0_2 = arith.constant 0 : index
    %1 = vector.load %arg2[%c0_1, %c0_2] : memref<32x96xf32, #tpu.memory_space<vmem>>, vector<32x96xf32>
    %c0_3 = arith.constant 0 : index
    %c0_4 = arith.constant 0 : index
    %2 = vector.load %arg3[%c0_3, %c0_4] : memref<1x32xf32, #tpu.memory_space<vmem>>, vector<1x32xf32>
    %3 = vector.shape_cast %2 : vector<1x32xf32> to vector<1x32xf32>
    %4 = vector.broadcast %3 : vector<1x32xf32> to vector<8x32xf32>
    %c0_5 = arith.constant 0 : index
    %c0_6 = arith.constant 0 : index
    %5 = vector.load %arg4[%c0_5, %c0_6] : memref<1x32xf32, #tpu.memory_space<vmem>>, vector<1x32xf32>
    %6 = vector.shape_cast %5 : vector<1x32xf32> to vector<1x32xf32>
    %7 = vector.broadcast %6 : vector<1x32xf32> to vector<8x32xf32>
    %cst = arith.constant 0.000000e+00 : f32
    %8 = vector.broadcast %cst : f32 to vector<8x32xf32>
    %c0_i32 = arith.constant 0 : i32
    %c7_i32 = arith.constant 7 : i32
    %9 = arith.subi %c7_i32, %c0_i32 : i32
    %10 = arith.index_cast %c0_i32 : i32 to index
    %c0_7 = arith.constant 0 : index
    %c0_8 = arith.constant 0 : index
    %11 = vector.load %arg0[%10, %c0_7, %c0_8] : memref<8x8x192xf32, #tpu.memory_space<vmem>>, vector<1x8x192xf32>
    %12 = vector.shape_cast %11 : vector<1x8x192xf32> to vector<8x192xf32>
    %13 = arith.index_cast %9 : i32 to index
    %c0_9 = arith.constant 0 : index
    %c0_10 = arith.constant 0 : index
    %14 = vector.load %arg0[%13, %c0_9, %c0_10] : memref<8x8x192xf32, #tpu.memory_space<vmem>>, vector<1x8x192xf32>
    %15 = vector.shape_cast %14 : vector<1x8x192xf32> to vector<8x192xf32>
    %cst_11 = arith.constant dense<0.000000e+00> : vector<8x96xf32>
    %16 = tpu.matmul %8, %0, %cst_11 {dimension_numbers = #tpu.dot_dimension_numbers<[1], [0], [0], [1], [0, 0, 1, 1], [], []>} : vector<8x32xf32>, vector<32x96xf32>, vector<8x96xf32> -> vector<8x96xf32>
    %cst_12 = arith.constant dense<0.000000e+00> : vector<8x96xf32>
    %17 = tpu.matmul %8, %1, %cst_12 {dimension_numbers = #tpu.dot_dimension_numbers<[1], [0], [0], [1], [0, 0, 1, 1], [], []>} : vector<8x32xf32>, vector<32x96xf32>, vector<8x96xf32> -> vector<8x96xf32>
    %18 = vector.extract_strided_slice %12 {offsets = [0, 0], sizes = [8, 32], strides = [1, 1]} : vector<8x192xf32> to vector<8x32xf32>
    %19 = vector.extract_strided_slice %16 {offsets = [0, 0], sizes = [8, 32], strides = [1, 1]} : vector<8x96xf32> to vector<8x32xf32>
    %20 = arith.addf %18, %19 : vector<8x32xf32>
    %21 = arith.negf %20 : vector<8x32xf32>
    %22 = math.exp %21 : vector<8x32xf32>
    %cst_13 = arith.constant 1.000000e+00 : f32
    %23 = vector.broadcast %cst_13 : f32 to vector<8x32xf32>
    %24 = arith.addf %23, %22 : vector<8x32xf32>
    %25 = arith.divf %23, %24 : vector<8x32xf32>
    %26 = vector.extract_strided_slice %12 {offsets = [0, 32], sizes = [8, 32], strides = [1, 1]} : vector<8x192xf32> to vector<8x32xf32>
    %27 = vector.extract_strided_slice %16 {offsets = [0, 32], sizes = [8, 32], strides = [1, 1]} : vector<8x96xf32> to vector<8x32xf32>
    %28 = arith.addf %26, %27 : vector<8x32xf32>
    %29 = arith.negf %28 : vector<8x32xf32>
    %30 = math.exp %29 : vector<8x32xf32>
    %cst_14 = arith.constant 1.000000e+00 : f32
    %31 = vector.broadcast %cst_14 : f32 to vector<8x32xf32>
    %32 = arith.addf %31, %30 : vector<8x32xf32>
    %33 = arith.divf %31, %32 : vector<8x32xf32>
    %34 = vector.extract_strided_slice %12 {offsets = [0, 64], sizes = [8, 32], strides = [1, 1]} : vector<8x192xf32> to vector<8x32xf32>
    %35 = vector.extract_strided_slice %16 {offsets = [0, 64], sizes = [8, 32], strides = [1, 1]} : vector<8x96xf32> to vector<8x32xf32>
    %36 = arith.addf %35, %4 : vector<8x32xf32>
    %37 = arith.mulf %25, %36 : vector<8x32xf32>
    %38 = arith.addf %34, %37 : vector<8x32xf32>
    %39 = math.tanh %38 : vector<8x32xf32>
    %cst_15 = arith.constant 1.000000e+00 : f32
    %40 = vector.broadcast %cst_15 : f32 to vector<8x32xf32>
    %41 = arith.subf %40, %33 : vector<8x32xf32>
    %42 = arith.mulf %41, %39 : vector<8x32xf32>
    %43 = arith.mulf %33, %8 : vector<8x32xf32>
    %44 = arith.addf %42, %43 : vector<8x32xf32>
    %45 = vector.extract_strided_slice %15 {offsets = [0, 96], sizes = [8, 32], strides = [1, 1]} : vector<8x192xf32> to vector<8x32xf32>
    %46 = vector.extract_strided_slice %17 {offsets = [0, 0], sizes = [8, 32], strides = [1, 1]} : vector<8x96xf32> to vector<8x32xf32>
    %47 = arith.addf %45, %46 : vector<8x32xf32>
    %48 = arith.negf %47 : vector<8x32xf32>
    %49 = math.exp %48 : vector<8x32xf32>
    %cst_16 = arith.constant 1.000000e+00 : f32
    %50 = vector.broadcast %cst_16 : f32 to vector<8x32xf32>
    %51 = arith.addf %50, %49 : vector<8x32xf32>
    %52 = arith.divf %50, %51 : vector<8x32xf32>
    %53 = vector.extract_strided_slice %15 {offsets = [0, 128], sizes = [8, 32], strides = [1, 1]} : vector<8x192xf32> to vector<8x32xf32>
    %54 = vector.extract_strided_slice %17 {offsets = [0, 32], sizes = [8, 32], strides = [1, 1]} : vector<8x96xf32> to vector<8x32xf32>
    %55 = arith.addf %53, %54 : vector<8x32xf32>
    %56 = arith.negf %55 : vector<8x32xf32>
    %57 = math.exp %56 : vector<8x32xf32>
    %cst_17 = arith.constant 1.000000e+00 : f32
    %58 = vector.broadcast %cst_17 : f32 to vector<8x32xf32>
    %59 = arith.addf %58, %57 : vector<8x32xf32>
    %60 = arith.divf %58, %59 : vector<8x32xf32>
    %61 = vector.extract_strided_slice %15 {offsets = [0, 160], sizes = [8, 32], strides = [1, 1]} : vector<8x192xf32> to vector<8x32xf32>
    %62 = vector.extract_strided_slice %17 {offsets = [0, 64], sizes = [8, 32], strides = [1, 1]} : vector<8x96xf32> to vector<8x32xf32>
    %63 = arith.addf %62, %7 : vector<8x32xf32>
    %64 = arith.mulf %52, %63 : vector<8x32xf32>
    %65 = arith.addf %61, %64 : vector<8x32xf32>
    %66 = math.tanh %65 : vector<8x32xf32>
    %cst_18 = arith.constant 1.000000e+00 : f32
    %67 = vector.broadcast %cst_18 : f32 to vector<8x32xf32>
    %68 = arith.subf %67, %60 : vector<8x32xf32>
    %69 = arith.mulf %68, %66 : vector<8x32xf32>
    %70 = arith.mulf %60, %8 : vector<8x32xf32>
    %71 = arith.addf %69, %70 : vector<8x32xf32>
    %72 = arith.index_cast %c0_i32 : i32 to index
    %c0_19 = arith.constant 0 : index
    %c0_20 = arith.constant 0 : index
    %73 = vector.load %arg5[%72, %c0_19, %c0_20] : memref<8x8x32xf32, #tpu.memory_space<vmem>>, vector<1x8x32xf32>
    %74 = vector.shape_cast %73 : vector<1x8x32xf32> to vector<8x32xf32>
    %75 = vector.shape_cast %44 : vector<8x32xf32> to vector<1x8x32xf32>
    tpu.vector_store %arg5[%72, %c0_19, %c0_20], %75 {strides = array<i32>} : memref<8x8x32xf32, #tpu.memory_space<vmem>>, vector<1x8x32xf32>,
    %76 = arith.index_cast %9 : i32 to index
    %c0_21 = arith.constant 0 : index
    %c0_22 = arith.constant 0 : index
    %77 = vector.load %arg6[%76, %c0_21, %c0_22] : memref<8x8x32xf32, #tpu.memory_space<vmem>>, vector<1x8x32xf32>
    %78 = vector.shape_cast %77 : vector<1x8x32xf32> to vector<8x32xf32>
    %79 = vector.shape_cast %71 : vector<8x32xf32> to vector<1x8x32xf32>
    tpu.vector_store %arg6[%76, %c0_21, %c0_22], %79 {strides = array<i32>} : memref<8x8x32xf32, #tpu.memory_space<vmem>>, vector<1x8x32xf32>,
    %c1_i32 = arith.constant 1 : i32
    %c7_i32_23 = arith.constant 7 : i32
    %80 = arith.subi %c7_i32_23, %c1_i32 : i32
    %81 = arith.index_cast %c1_i32 : i32 to index
    %c0_24 = arith.constant 0 : index
    %c0_25 = arith.constant 0 : index
    %82 = vector.load %arg0[%81, %c0_24, %c0_25] : memref<8x8x192xf32, #tpu.memory_space<vmem>>, vector<1x8x192xf32>
    %83 = vector.shape_cast %82 : vector<1x8x192xf32> to vector<8x192xf32>
    %84 = arith.index_cast %80 : i32 to index
    %c0_26 = arith.constant 0 : index
    %c0_27 = arith.constant 0 : index
    %85 = vector.load %arg0[%84, %c0_26, %c0_27] : memref<8x8x192xf32, #tpu.memory_space<vmem>>, vector<1x8x192xf32>
    %86 = vector.shape_cast %85 : vector<1x8x192xf32> to vector<8x192xf32>
    %cst_28 = arith.constant dense<0.000000e+00> : vector<8x96xf32>
    %87 = tpu.matmul %44, %0, %cst_28 {dimension_numbers = #tpu.dot_dimension_numbers<[1], [0], [0], [1], [0, 0, 1, 1], [], []>} : vector<8x32xf32>, vector<32x96xf32>, vector<8x96xf32> -> vector<8x96xf32>
    %cst_29 = arith.constant dense<0.000000e+00> : vector<8x96xf32>
    %88 = tpu.matmul %71, %1, %cst_29 {dimension_numbers = #tpu.dot_dimension_numbers<[1], [0], [0], [1], [0, 0, 1, 1], [], []>} : vector<8x32xf32>, vector<32x96xf32>, vector<8x96xf32> -> vector<8x96xf32>
    %89 = vector.extract_strided_slice %83 {offsets = [0, 0], sizes = [8, 32], strides = [1, 1]} : vector<8x192xf32> to vector<8x32xf32>
    %90 = vector.extract_strided_slice %87 {offsets = [0, 0], sizes = [8, 32], strides = [1, 1]} : vector<8x96xf32> to vector<8x32xf32>
    %91 = arith.addf %89, %90 : vector<8x32xf32>
    %92 = arith.negf %91 : vector<8x32xf32>
    %93 = math.exp %92 : vector<8x32xf32>
    %cst_30 = arith.constant 1.000000e+00 : f32
    %94 = vector.broadcast %cst_30 : f32 to vector<8x32xf32>
    %95 = arith.addf %94, %93 : vector<8x32xf32>
    %96 = arith.divf %94, %95 : vector<8x32xf32>
    %97 = vector.extract_strided_slice %83 {offsets = [0, 32], sizes = [8, 32], strides = [1, 1]} : vector<8x192xf32> to vector<8x32xf32>
    %98 = vector.extract_strided_slice %87 {offsets = [0, 32], sizes = [8, 32], strides = [1, 1]} : vector<8x96xf32> to vector<8x32xf32>
    %99 = arith.addf %97, %98 : vector<8x32xf32>
    %100 = arith.negf %99 : vector<8x32xf32>
    %101 = math.exp %100 : vector<8x32xf32>
    %cst_31 = arith.constant 1.000000e+00 : f32
    %102 = vector.broadcast %cst_31 : f32 to vector<8x32xf32>
    %103 = arith.addf %102, %101 : vector<8x32xf32>
    %104 = arith.divf %102, %103 : vector<8x32xf32>
    %105 = vector.extract_strided_slice %83 {offsets = [0, 64], sizes = [8, 32], strides = [1, 1]} : vector<8x192xf32> to vector<8x32xf32>
    %106 = vector.extract_strided_slice %87 {offsets = [0, 64], sizes = [8, 32], strides = [1, 1]} : vector<8x96xf32> to vector<8x32xf32>
    %107 = arith.addf %106, %4 : vector<8x32xf32>
    %108 = arith.mulf %96, %107 : vector<8x32xf32>
    %109 = arith.addf %105, %108 : vector<8x32xf32>
    %110 = math.tanh %109 : vector<8x32xf32>
    %cst_32 = arith.constant 1.000000e+00 : f32
    %111 = vector.broadcast %cst_32 : f32 to vector<8x32xf32>
    %112 = arith.subf %111, %104 : vector<8x32xf32>
    %113 = arith.mulf %112, %110 : vector<8x32xf32>
    %114 = arith.mulf %104, %44 : vector<8x32xf32>
    %115 = arith.addf %113, %114 : vector<8x32xf32>
    %116 = vector.extract_strided_slice %86 {offsets = [0, 96], sizes = [8, 32], strides = [1, 1]} : vector<8x192xf32> to vector<8x32xf32>
    %117 = vector.extract_strided_slice %88 {offsets = [0, 0], sizes = [8, 32], strides = [1, 1]} : vector<8x96xf32> to vector<8x32xf32>
    %118 = arith.addf %116, %117 : vector<8x32xf32>
    %119 = arith.negf %118 : vector<8x32xf32>
    %120 = math.exp %119 : vector<8x32xf32>
    %cst_33 = arith.constant 1.000000e+00 : f32
    %121 = vector.broadcast %cst_33 : f32 to vector<8x32xf32>
    %122 = arith.addf %121, %120 : vector<8x32xf32>
    %123 = arith.divf %121, %122 : vector<8x32xf32>
    %124 = vector.extract_strided_slice %86 {offsets = [0, 128], sizes = [8, 32], strides = [1, 1]} : vector<8x192xf32> to vector<8x32xf32>
    %125 = vector.extract_strided_slice %88 {offsets = [0, 32], sizes = [8, 32], strides = [1, 1]} : vector<8x96xf32> to vector<8x32xf32>
    %126 = arith.addf %124, %125 : vector<8x32xf32>
    %127 = arith.negf %126 : vector<8x32xf32>
    %128 = math.exp %127 : vector<8x32xf32>
    %cst_34 = arith.constant 1.000000e+00 : f32
    %129 = vector.broadcast %cst_34 : f32 to vector<8x32xf32>
    %130 = arith.addf %129, %128 : vector<8x32xf32>
    %131 = arith.divf %129, %130 : vector<8x32xf32>
    %132 = vector.extract_strided_slice %86 {offsets = [0, 160], sizes = [8, 32], strides = [1, 1]} : vector<8x192xf32> to vector<8x32xf32>
    %133 = vector.extract_strided_slice %88 {offsets = [0, 64], sizes = [8, 32], strides = [1, 1]} : vector<8x96xf32> to vector<8x32xf32>
    %134 = arith.addf %133, %7 : vector<8x32xf32>
    %135 = arith.mulf %123, %134 : vector<8x32xf32>
    %136 = arith.addf %132, %135 : vector<8x32xf32>
    %137 = math.tanh %136 : vector<8x32xf32>
    %cst_35 = arith.constant 1.000000e+00 : f32
    %138 = vector.broadcast %cst_35 : f32 to vector<8x32xf32>
    %139 = arith.subf %138, %131 : vector<8x32xf32>
    %140 = arith.mulf %139, %137 : vector<8x32xf32>
    %141 = arith.mulf %131, %71 : vector<8x32xf32>
    %142 = arith.addf %140, %141 : vector<8x32xf32>
    %143 = arith.index_cast %c1_i32 : i32 to index
    %c0_36 = arith.constant 0 : index
    %c0_37 = arith.constant 0 : index
    %144 = vector.load %arg5[%143, %c0_36, %c0_37] : memref<8x8x32xf32, #tpu.memory_space<vmem>>, vector<1x8x32xf32>
    %145 = vector.shape_cast %144 : vector<1x8x32xf32> to vector<8x32xf32>
    %146 = vector.shape_cast %115 : vector<8x32xf32> to vector<1x8x32xf32>
    tpu.vector_store %arg5[%143, %c0_36, %c0_37], %146 {strides = array<i32>} : memref<8x8x32xf32, #tpu.memory_space<vmem>>, vector<1x8x32xf32>,
    %147 = arith.index_cast %80 : i32 to index
    %c0_38 = arith.constant 0 : index
    %c0_39 = arith.constant 0 : index
    %148 = vector.load %arg6[%147, %c0_38, %c0_39] : memref<8x8x32xf32, #tpu.memory_space<vmem>>, vector<1x8x32xf32>
    %149 = vector.shape_cast %148 : vector<1x8x32xf32> to vector<8x32xf32>
    %150 = vector.shape_cast %142 : vector<8x32xf32> to vector<1x8x32xf32>
    tpu.vector_store %arg6[%147, %c0_38, %c0_39], %150 {strides = array<i32>} : memref<8x8x32xf32, #tpu.memory_space<vmem>>, vector<1x8x32xf32>,
    %c2_i32 = arith.constant 2 : i32
    %c7_i32_40 = arith.constant 7 : i32
    %151 = arith.subi %c7_i32_40, %c2_i32 : i32
    %152 = arith.index_cast %c2_i32 : i32 to index
    %c0_41 = arith.constant 0 : index
    %c0_42 = arith.constant 0 : index
    %153 = vector.load %arg0[%152, %c0_41, %c0_42] : memref<8x8x192xf32, #tpu.memory_space<vmem>>, vector<1x8x192xf32>
    %154 = vector.shape_cast %153 : vector<1x8x192xf32> to vector<8x192xf32>
    %155 = arith.index_cast %151 : i32 to index
    %c0_43 = arith.constant 0 : index
    %c0_44 = arith.constant 0 : index
    %156 = vector.load %arg0[%155, %c0_43, %c0_44] : memref<8x8x192xf32, #tpu.memory_space<vmem>>, vector<1x8x192xf32>
    %157 = vector.shape_cast %156 : vector<1x8x192xf32> to vector<8x192xf32>
    %cst_45 = arith.constant dense<0.000000e+00> : vector<8x96xf32>
    %158 = tpu.matmul %115, %0, %cst_45 {dimension_numbers = #tpu.dot_dimension_numbers<[1], [0], [0], [1], [0, 0, 1, 1], [], []>} : vector<8x32xf32>, vector<32x96xf32>, vector<8x96xf32> -> vector<8x96xf32>
    %cst_46 = arith.constant dense<0.000000e+00> : vector<8x96xf32>
    %159 = tpu.matmul %142, %1, %cst_46 {dimension_numbers = #tpu.dot_dimension_numbers<[1], [0], [0], [1], [0, 0, 1, 1], [], []>} : vector<8x32xf32>, vector<32x96xf32>, vector<8x96xf32> -> vector<8x96xf32>
    %160 = vector.extract_strided_slice %154 {offsets = [0, 0], sizes = [8, 32], strides = [1, 1]} : vector<8x192xf32> to vector<8x32xf32>
    %161 = vector.extract_strided_slice %158 {offsets = [0, 0], sizes = [8, 32], strides = [1, 1]} : vector<8x96xf32> to vector<8x32xf32>
    %162 = arith.addf %160, %161 : vector<8x32xf32>
    %163 = arith.negf %162 : vector<8x32xf32>
    %164 = math.exp %163 : vector<8x32xf32>
    %cst_47 = arith.constant 1.000000e+00 : f32
    %165 = vector.broadcast %cst_47 : f32 to vector<8x32xf32>
    %166 = arith.addf %165, %164 : vector<8x32xf32>
    %167 = arith.divf %165, %166 : vector<8x32xf32>
    %168 = vector.extract_strided_slice %154 {offsets = [0, 32], sizes = [8, 32], strides = [1, 1]} : vector<8x192xf32> to vector<8x32xf32>
    %169 = vector.extract_strided_slice %158 {offsets = [0, 32], sizes = [8, 32], strides = [1, 1]} : vector<8x96xf32> to vector<8x32xf32>
    %170 = arith.addf %168, %169 : vector<8x32xf32>
    %171 = arith.negf %170 : vector<8x32xf32>
    %172 = math.exp %171 : vector<8x32xf32>
    %cst_48 = arith.constant 1.000000e+00 : f32
    %173 = vector.broadcast %cst_48 : f32 to vector<8x32xf32>
    %174 = arith.addf %173, %172 : vector<8x32xf32>
    %175 = arith.divf %173, %174 : vector<8x32xf32>
    %176 = vector.extract_strided_slice %154 {offsets = [0, 64], sizes = [8, 32], strides = [1, 1]} : vector<8x192xf32> to vector<8x32xf32>
    %177 = vector.extract_strided_slice %158 {offsets = [0, 64], sizes = [8, 32], strides = [1, 1]} : vector<8x96xf32> to vector<8x32xf32>
    %178 = arith.addf %177, %4 : vector<8x32xf32>
    %179 = arith.mulf %167, %178 : vector<8x32xf32>
    %180 = arith.addf %176, %179 : vector<8x32xf32>
    %181 = math.tanh %180 : vector<8x32xf32>
    %cst_49 = arith.constant 1.000000e+00 : f32
    %182 = vector.broadcast %cst_49 : f32 to vector<8x32xf32>
    %183 = arith.subf %182, %175 : vector<8x32xf32>
    %184 = arith.mulf %183, %181 : vector<8x32xf32>
    %185 = arith.mulf %175, %115 : vector<8x32xf32>
    %186 = arith.addf %184, %185 : vector<8x32xf32>
    %187 = vector.extract_strided_slice %157 {offsets = [0, 96], sizes = [8, 32], strides = [1, 1]} : vector<8x192xf32> to vector<8x32xf32>
    %188 = vector.extract_strided_slice %159 {offsets = [0, 0], sizes = [8, 32], strides = [1, 1]} : vector<8x96xf32> to vector<8x32xf32>
    %189 = arith.addf %187, %188 : vector<8x32xf32>
    %190 = arith.negf %189 : vector<8x32xf32>
    %191 = math.exp %190 : vector<8x32xf32>
    %cst_50 = arith.constant 1.000000e+00 : f32
    %192 = vector.broadcast %cst_50 : f32 to vector<8x32xf32>
    %193 = arith.addf %192, %191 : vector<8x32xf32>
    %194 = arith.divf %192, %193 : vector<8x32xf32>
    %195 = vector.extract_strided_slice %157 {offsets = [0, 128], sizes = [8, 32], strides = [1, 1]} : vector<8x192xf32> to vector<8x32xf32>
    %196 = vector.extract_strided_slice %159 {offsets = [0, 32], sizes = [8, 32], strides = [1, 1]} : vector<8x96xf32> to vector<8x32xf32>
    %197 = arith.addf %195, %196 : vector<8x32xf32>
    %198 = arith.negf %197 : vector<8x32xf32>
    %199 = math.exp %198 : vector<8x32xf32>
    %cst_51 = arith.constant 1.000000e+00 : f32
    %200 = vector.broadcast %cst_51 : f32 to vector<8x32xf32>
    %201 = arith.addf %200, %199 : vector<8x32xf32>
    %202 = arith.divf %200, %201 : vector<8x32xf32>
    %203 = vector.extract_strided_slice %157 {offsets = [0, 160], sizes = [8, 32], strides = [1, 1]} : vector<8x192xf32> to vector<8x32xf32>
    %204 = vector.extract_strided_slice %159 {offsets = [0, 64], sizes = [8, 32], strides = [1, 1]} : vector<8x96xf32> to vector<8x32xf32>
    %205 = arith.addf %204, %7 : vector<8x32xf32>
    %206 = arith.mulf %194, %205 : vector<8x32xf32>
    %207 = arith.addf %203, %206 : vector<8x32xf32>
    %208 = math.tanh %207 : vector<8x32xf32>
    %cst_52 = arith.constant 1.000000e+00 : f32
    %209 = vector.broadcast %cst_52 : f32 to vector<8x32xf32>
    %210 = arith.subf %209, %202 : vector<8x32xf32>
    %211 = arith.mulf %210, %208 : vector<8x32xf32>
    %212 = arith.mulf %202, %142 : vector<8x32xf32>
    %213 = arith.addf %211, %212 : vector<8x32xf32>
    %214 = arith.index_cast %c2_i32 : i32 to index
    %c0_53 = arith.constant 0 : index
    %c0_54 = arith.constant 0 : index
    %215 = vector.load %arg5[%214, %c0_53, %c0_54] : memref<8x8x32xf32, #tpu.memory_space<vmem>>, vector<1x8x32xf32>
    %216 = vector.shape_cast %215 : vector<1x8x32xf32> to vector<8x32xf32>
    %217 = vector.shape_cast %186 : vector<8x32xf32> to vector<1x8x32xf32>
    tpu.vector_store %arg5[%214, %c0_53, %c0_54], %217 {strides = array<i32>} : memref<8x8x32xf32, #tpu.memory_space<vmem>>, vector<1x8x32xf32>,
    %218 = arith.index_cast %151 : i32 to index
    %c0_55 = arith.constant 0 : index
    %c0_56 = arith.constant 0 : index
    %219 = vector.load %arg6[%218, %c0_55, %c0_56] : memref<8x8x32xf32, #tpu.memory_space<vmem>>, vector<1x8x32xf32>
    %220 = vector.shape_cast %219 : vector<1x8x32xf32> to vector<8x32xf32>
    %221 = vector.shape_cast %213 : vector<8x32xf32> to vector<1x8x32xf32>
    tpu.vector_store %arg6[%218, %c0_55, %c0_56], %221 {strides = array<i32>} : memref<8x8x32xf32, #tpu.memory_space<vmem>>, vector<1x8x32xf32>,
    %c3_i32 = arith.constant 3 : i32
    %c7_i32_57 = arith.constant 7 : i32
    %222 = arith.subi %c7_i32_57, %c3_i32 : i32
    %223 = arith.index_cast %c3_i32 : i32 to index
    %c0_58 = arith.constant 0 : index
    %c0_59 = arith.constant 0 : index
    %224 = vector.load %arg0[%223, %c0_58, %c0_59] : memref<8x8x192xf32, #tpu.memory_space<vmem>>, vector<1x8x192xf32>
    %225 = vector.shape_cast %224 : vector<1x8x192xf32> to vector<8x192xf32>
    %226 = arith.index_cast %222 : i32 to index
    %c0_60 = arith.constant 0 : index
    %c0_61 = arith.constant 0 : index
    %227 = vector.load %arg0[%226, %c0_60, %c0_61] : memref<8x8x192xf32, #tpu.memory_space<vmem>>, vector<1x8x192xf32>
    %228 = vector.shape_cast %227 : vector<1x8x192xf32> to vector<8x192xf32>
    %cst_62 = arith.constant dense<0.000000e+00> : vector<8x96xf32>
    %229 = tpu.matmul %186, %0, %cst_62 {dimension_numbers = #tpu.dot_dimension_numbers<[1], [0], [0], [1], [0, 0, 1, 1], [], []>} : vector<8x32xf32>, vector<32x96xf32>, vector<8x96xf32> -> vector<8x96xf32>
    %cst_63 = arith.constant dense<0.000000e+00> : vector<8x96xf32>
    %230 = tpu.matmul %213, %1, %cst_63 {dimension_numbers = #tpu.dot_dimension_numbers<[1], [0], [0], [1], [0, 0, 1, 1], [], []>} : vector<8x32xf32>, vector<32x96xf32>, vector<8x96xf32> -> vector<8x96xf32>
    %231 = vector.extract_strided_slice %225 {offsets = [0, 0], sizes = [8, 32], strides = [1, 1]} : vector<8x192xf32> to vector<8x32xf32>
    %232 = vector.extract_strided_slice %229 {offsets = [0, 0], sizes = [8, 32], strides = [1, 1]} : vector<8x96xf32> to vector<8x32xf32>
    %233 = arith.addf %231, %232 : vector<8x32xf32>
    %234 = arith.negf %233 : vector<8x32xf32>
    %235 = math.exp %234 : vector<8x32xf32>
    %cst_64 = arith.constant 1.000000e+00 : f32
    %236 = vector.broadcast %cst_64 : f32 to vector<8x32xf32>
    %237 = arith.addf %236, %235 : vector<8x32xf32>
    %238 = arith.divf %236, %237 : vector<8x32xf32>
    %239 = vector.extract_strided_slice %225 {offsets = [0, 32], sizes = [8, 32], strides = [1, 1]} : vector<8x192xf32> to vector<8x32xf32>
    %240 = vector.extract_strided_slice %229 {offsets = [0, 32], sizes = [8, 32], strides = [1, 1]} : vector<8x96xf32> to vector<8x32xf32>
    %241 = arith.addf %239, %240 : vector<8x32xf32>
    %242 = arith.negf %241 : vector<8x32xf32>
    %243 = math.exp %242 : vector<8x32xf32>
    %cst_65 = arith.constant 1.000000e+00 : f32
    %244 = vector.broadcast %cst_65 : f32 to vector<8x32xf32>
    %245 = arith.addf %244, %243 : vector<8x32xf32>
    %246 = arith.divf %244, %245 : vector<8x32xf32>
    %247 = vector.extract_strided_slice %225 {offsets = [0, 64], sizes = [8, 32], strides = [1, 1]} : vector<8x192xf32> to vector<8x32xf32>
    %248 = vector.extract_strided_slice %229 {offsets = [0, 64], sizes = [8, 32], strides = [1, 1]} : vector<8x96xf32> to vector<8x32xf32>
    %249 = arith.addf %248, %4 : vector<8x32xf32>
    %250 = arith.mulf %238, %249 : vector<8x32xf32>
    %251 = arith.addf %247, %250 : vector<8x32xf32>
    %252 = math.tanh %251 : vector<8x32xf32>
    %cst_66 = arith.constant 1.000000e+00 : f32
    %253 = vector.broadcast %cst_66 : f32 to vector<8x32xf32>
    %254 = arith.subf %253, %246 : vector<8x32xf32>
    %255 = arith.mulf %254, %252 : vector<8x32xf32>
    %256 = arith.mulf %246, %186 : vector<8x32xf32>
    %257 = arith.addf %255, %256 : vector<8x32xf32>
    %258 = vector.extract_strided_slice %228 {offsets = [0, 96], sizes = [8, 32], strides = [1, 1]} : vector<8x192xf32> to vector<8x32xf32>
    %259 = vector.extract_strided_slice %230 {offsets = [0, 0], sizes = [8, 32], strides = [1, 1]} : vector<8x96xf32> to vector<8x32xf32>
    %260 = arith.addf %258, %259 : vector<8x32xf32>
    %261 = arith.negf %260 : vector<8x32xf32>
    %262 = math.exp %261 : vector<8x32xf32>
    %cst_67 = arith.constant 1.000000e+00 : f32
    %263 = vector.broadcast %cst_67 : f32 to vector<8x32xf32>
    %264 = arith.addf %263, %262 : vector<8x32xf32>
    %265 = arith.divf %263, %264 : vector<8x32xf32>
    %266 = vector.extract_strided_slice %228 {offsets = [0, 128], sizes = [8, 32], strides = [1, 1]} : vector<8x192xf32> to vector<8x32xf32>
    %267 = vector.extract_strided_slice %230 {offsets = [0, 32], sizes = [8, 32], strides = [1, 1]} : vector<8x96xf32> to vector<8x32xf32>
    %268 = arith.addf %266, %267 : vector<8x32xf32>
    %269 = arith.negf %268 : vector<8x32xf32>
    %270 = math.exp %269 : vector<8x32xf32>
    %cst_68 = arith.constant 1.000000e+00 : f32
    %271 = vector.broadcast %cst_68 : f32 to vector<8x32xf32>
    %272 = arith.addf %271, %270 : vector<8x32xf32>
    %273 = arith.divf %271, %272 : vector<8x32xf32>
    %274 = vector.extract_strided_slice %228 {offsets = [0, 160], sizes = [8, 32], strides = [1, 1]} : vector<8x192xf32> to vector<8x32xf32>
    %275 = vector.extract_strided_slice %230 {offsets = [0, 64], sizes = [8, 32], strides = [1, 1]} : vector<8x96xf32> to vector<8x32xf32>
    %276 = arith.addf %275, %7 : vector<8x32xf32>
    %277 = arith.mulf %265, %276 : vector<8x32xf32>
    %278 = arith.addf %274, %277 : vector<8x32xf32>
    %279 = math.tanh %278 : vector<8x32xf32>
    %cst_69 = arith.constant 1.000000e+00 : f32
    %280 = vector.broadcast %cst_69 : f32 to vector<8x32xf32>
    %281 = arith.subf %280, %273 : vector<8x32xf32>
    %282 = arith.mulf %281, %279 : vector<8x32xf32>
    %283 = arith.mulf %273, %213 : vector<8x32xf32>
    %284 = arith.addf %282, %283 : vector<8x32xf32>
    %285 = arith.index_cast %c3_i32 : i32 to index
    %c0_70 = arith.constant 0 : index
    %c0_71 = arith.constant 0 : index
    %286 = vector.load %arg5[%285, %c0_70, %c0_71] : memref<8x8x32xf32, #tpu.memory_space<vmem>>, vector<1x8x32xf32>
    %287 = vector.shape_cast %286 : vector<1x8x32xf32> to vector<8x32xf32>
    %288 = vector.shape_cast %257 : vector<8x32xf32> to vector<1x8x32xf32>
    tpu.vector_store %arg5[%285, %c0_70, %c0_71], %288 {strides = array<i32>} : memref<8x8x32xf32, #tpu.memory_space<vmem>>, vector<1x8x32xf32>,
    %289 = arith.index_cast %222 : i32 to index
    %c0_72 = arith.constant 0 : index
    %c0_73 = arith.constant 0 : index
    %290 = vector.load %arg6[%289, %c0_72, %c0_73] : memref<8x8x32xf32, #tpu.memory_space<vmem>>, vector<1x8x32xf32>
    %291 = vector.shape_cast %290 : vector<1x8x32xf32> to vector<8x32xf32>
    %292 = vector.shape_cast %284 : vector<8x32xf32> to vector<1x8x32xf32>
    tpu.vector_store %arg6[%289, %c0_72, %c0_73], %292 {strides = array<i32>} : memref<8x8x32xf32, #tpu.memory_space<vmem>>, vector<1x8x32xf32>,
    %c4_i32 = arith.constant 4 : i32
    %c7_i32_74 = arith.constant 7 : i32
    %293 = arith.subi %c7_i32_74, %c4_i32 : i32
    %294 = arith.index_cast %c4_i32 : i32 to index
    %c0_75 = arith.constant 0 : index
    %c0_76 = arith.constant 0 : index
    %295 = vector.load %arg0[%294, %c0_75, %c0_76] : memref<8x8x192xf32, #tpu.memory_space<vmem>>, vector<1x8x192xf32>
    %296 = vector.shape_cast %295 : vector<1x8x192xf32> to vector<8x192xf32>
    %297 = arith.index_cast %293 : i32 to index
    %c0_77 = arith.constant 0 : index
    %c0_78 = arith.constant 0 : index
    %298 = vector.load %arg0[%297, %c0_77, %c0_78] : memref<8x8x192xf32, #tpu.memory_space<vmem>>, vector<1x8x192xf32>
    %299 = vector.shape_cast %298 : vector<1x8x192xf32> to vector<8x192xf32>
    %cst_79 = arith.constant dense<0.000000e+00> : vector<8x96xf32>
    %300 = tpu.matmul %257, %0, %cst_79 {dimension_numbers = #tpu.dot_dimension_numbers<[1], [0], [0], [1], [0, 0, 1, 1], [], []>} : vector<8x32xf32>, vector<32x96xf32>, vector<8x96xf32> -> vector<8x96xf32>
    %cst_80 = arith.constant dense<0.000000e+00> : vector<8x96xf32>
    %301 = tpu.matmul %284, %1, %cst_80 {dimension_numbers = #tpu.dot_dimension_numbers<[1], [0], [0], [1], [0, 0, 1, 1], [], []>} : vector<8x32xf32>, vector<32x96xf32>, vector<8x96xf32> -> vector<8x96xf32>
    %302 = vector.extract_strided_slice %296 {offsets = [0, 0], sizes = [8, 32], strides = [1, 1]} : vector<8x192xf32> to vector<8x32xf32>
    %303 = vector.extract_strided_slice %300 {offsets = [0, 0], sizes = [8, 32], strides = [1, 1]} : vector<8x96xf32> to vector<8x32xf32>
    %304 = arith.addf %302, %303 : vector<8x32xf32>
    %305 = arith.negf %304 : vector<8x32xf32>
    %306 = math.exp %305 : vector<8x32xf32>
    %cst_81 = arith.constant 1.000000e+00 : f32
    %307 = vector.broadcast %cst_81 : f32 to vector<8x32xf32>
    %308 = arith.addf %307, %306 : vector<8x32xf32>
    %309 = arith.divf %307, %308 : vector<8x32xf32>
    %310 = vector.extract_strided_slice %296 {offsets = [0, 32], sizes = [8, 32], strides = [1, 1]} : vector<8x192xf32> to vector<8x32xf32>
    %311 = vector.extract_strided_slice %300 {offsets = [0, 32], sizes = [8, 32], strides = [1, 1]} : vector<8x96xf32> to vector<8x32xf32>
    %312 = arith.addf %310, %311 : vector<8x32xf32>
    %313 = arith.negf %312 : vector<8x32xf32>
    %314 = math.exp %313 : vector<8x32xf32>
    %cst_82 = arith.constant 1.000000e+00 : f32
    %315 = vector.broadcast %cst_82 : f32 to vector<8x32xf32>
    %316 = arith.addf %315, %314 : vector<8x32xf32>
    %317 = arith.divf %315, %316 : vector<8x32xf32>
    %318 = vector.extract_strided_slice %296 {offsets = [0, 64], sizes = [8, 32], strides = [1, 1]} : vector<8x192xf32> to vector<8x32xf32>
    %319 = vector.extract_strided_slice %300 {offsets = [0, 64], sizes = [8, 32], strides = [1, 1]} : vector<8x96xf32> to vector<8x32xf32>
    %320 = arith.addf %319, %4 : vector<8x32xf32>
    %321 = arith.mulf %309, %320 : vector<8x32xf32>
    %322 = arith.addf %318, %321 : vector<8x32xf32>
    %323 = math.tanh %322 : vector<8x32xf32>
    %cst_83 = arith.constant 1.000000e+00 : f32
    %324 = vector.broadcast %cst_83 : f32 to vector<8x32xf32>
    %325 = arith.subf %324, %317 : vector<8x32xf32>
    %326 = arith.mulf %325, %323 : vector<8x32xf32>
    %327 = arith.mulf %317, %257 : vector<8x32xf32>
    %328 = arith.addf %326, %327 : vector<8x32xf32>
    %329 = vector.extract_strided_slice %299 {offsets = [0, 96], sizes = [8, 32], strides = [1, 1]} : vector<8x192xf32> to vector<8x32xf32>
    %330 = vector.extract_strided_slice %301 {offsets = [0, 0], sizes = [8, 32], strides = [1, 1]} : vector<8x96xf32> to vector<8x32xf32>
    %331 = arith.addf %329, %330 : vector<8x32xf32>
    %332 = arith.negf %331 : vector<8x32xf32>
    %333 = math.exp %332 : vector<8x32xf32>
    %cst_84 = arith.constant 1.000000e+00 : f32
    %334 = vector.broadcast %cst_84 : f32 to vector<8x32xf32>
    %335 = arith.addf %334, %333 : vector<8x32xf32>
    %336 = arith.divf %334, %335 : vector<8x32xf32>
    %337 = vector.extract_strided_slice %299 {offsets = [0, 128], sizes = [8, 32], strides = [1, 1]} : vector<8x192xf32> to vector<8x32xf32>
    %338 = vector.extract_strided_slice %301 {offsets = [0, 32], sizes = [8, 32], strides = [1, 1]} : vector<8x96xf32> to vector<8x32xf32>
    %339 = arith.addf %337, %338 : vector<8x32xf32>
    %340 = arith.negf %339 : vector<8x32xf32>
    %341 = math.exp %340 : vector<8x32xf32>
    %cst_85 = arith.constant 1.000000e+00 : f32
    %342 = vector.broadcast %cst_85 : f32 to vector<8x32xf32>
    %343 = arith.addf %342, %341 : vector<8x32xf32>
    %344 = arith.divf %342, %343 : vector<8x32xf32>
    %345 = vector.extract_strided_slice %299 {offsets = [0, 160], sizes = [8, 32], strides = [1, 1]} : vector<8x192xf32> to vector<8x32xf32>
    %346 = vector.extract_strided_slice %301 {offsets = [0, 64], sizes = [8, 32], strides = [1, 1]} : vector<8x96xf32> to vector<8x32xf32>
    %347 = arith.addf %346, %7 : vector<8x32xf32>
    %348 = arith.mulf %336, %347 : vector<8x32xf32>
    %349 = arith.addf %345, %348 : vector<8x32xf32>
    %350 = math.tanh %349 : vector<8x32xf32>
    %cst_86 = arith.constant 1.000000e+00 : f32
    %351 = vector.broadcast %cst_86 : f32 to vector<8x32xf32>
    %352 = arith.subf %351, %344 : vector<8x32xf32>
    %353 = arith.mulf %352, %350 : vector<8x32xf32>
    %354 = arith.mulf %344, %284 : vector<8x32xf32>
    %355 = arith.addf %353, %354 : vector<8x32xf32>
    %356 = arith.index_cast %c4_i32 : i32 to index
    %c0_87 = arith.constant 0 : index
    %c0_88 = arith.constant 0 : index
    %357 = vector.load %arg5[%356, %c0_87, %c0_88] : memref<8x8x32xf32, #tpu.memory_space<vmem>>, vector<1x8x32xf32>
    %358 = vector.shape_cast %357 : vector<1x8x32xf32> to vector<8x32xf32>
    %359 = vector.shape_cast %328 : vector<8x32xf32> to vector<1x8x32xf32>
    tpu.vector_store %arg5[%356, %c0_87, %c0_88], %359 {strides = array<i32>} : memref<8x8x32xf32, #tpu.memory_space<vmem>>, vector<1x8x32xf32>,
    %360 = arith.index_cast %293 : i32 to index
    %c0_89 = arith.constant 0 : index
    %c0_90 = arith.constant 0 : index
    %361 = vector.load %arg6[%360, %c0_89, %c0_90] : memref<8x8x32xf32, #tpu.memory_space<vmem>>, vector<1x8x32xf32>
    %362 = vector.shape_cast %361 : vector<1x8x32xf32> to vector<8x32xf32>
    %363 = vector.shape_cast %355 : vector<8x32xf32> to vector<1x8x32xf32>
    tpu.vector_store %arg6[%360, %c0_89, %c0_90], %363 {strides = array<i32>} : memref<8x8x32xf32, #tpu.memory_space<vmem>>, vector<1x8x32xf32>,
    %c5_i32 = arith.constant 5 : i32
    %c7_i32_91 = arith.constant 7 : i32
    %364 = arith.subi %c7_i32_91, %c5_i32 : i32
    %365 = arith.index_cast %c5_i32 : i32 to index
    %c0_92 = arith.constant 0 : index
    %c0_93 = arith.constant 0 : index
    %366 = vector.load %arg0[%365, %c0_92, %c0_93] : memref<8x8x192xf32, #tpu.memory_space<vmem>>, vector<1x8x192xf32>
    %367 = vector.shape_cast %366 : vector<1x8x192xf32> to vector<8x192xf32>
    %368 = arith.index_cast %364 : i32 to index
    %c0_94 = arith.constant 0 : index
    %c0_95 = arith.constant 0 : index
    %369 = vector.load %arg0[%368, %c0_94, %c0_95] : memref<8x8x192xf32, #tpu.memory_space<vmem>>, vector<1x8x192xf32>
    %370 = vector.shape_cast %369 : vector<1x8x192xf32> to vector<8x192xf32>
    %cst_96 = arith.constant dense<0.000000e+00> : vector<8x96xf32>
    %371 = tpu.matmul %328, %0, %cst_96 {dimension_numbers = #tpu.dot_dimension_numbers<[1], [0], [0], [1], [0, 0, 1, 1], [], []>} : vector<8x32xf32>, vector<32x96xf32>, vector<8x96xf32> -> vector<8x96xf32>
    %cst_97 = arith.constant dense<0.000000e+00> : vector<8x96xf32>
    %372 = tpu.matmul %355, %1, %cst_97 {dimension_numbers = #tpu.dot_dimension_numbers<[1], [0], [0], [1], [0, 0, 1, 1], [], []>} : vector<8x32xf32>, vector<32x96xf32>, vector<8x96xf32> -> vector<8x96xf32>
    %373 = vector.extract_strided_slice %367 {offsets = [0, 0], sizes = [8, 32], strides = [1, 1]} : vector<8x192xf32> to vector<8x32xf32>
    %374 = vector.extract_strided_slice %371 {offsets = [0, 0], sizes = [8, 32], strides = [1, 1]} : vector<8x96xf32> to vector<8x32xf32>
    %375 = arith.addf %373, %374 : vector<8x32xf32>
    %376 = arith.negf %375 : vector<8x32xf32>
    %377 = math.exp %376 : vector<8x32xf32>
    %cst_98 = arith.constant 1.000000e+00 : f32
    %378 = vector.broadcast %cst_98 : f32 to vector<8x32xf32>
    %379 = arith.addf %378, %377 : vector<8x32xf32>
    %380 = arith.divf %378, %379 : vector<8x32xf32>
    %381 = vector.extract_strided_slice %367 {offsets = [0, 32], sizes = [8, 32], strides = [1, 1]} : vector<8x192xf32> to vector<8x32xf32>
    %382 = vector.extract_strided_slice %371 {offsets = [0, 32], sizes = [8, 32], strides = [1, 1]} : vector<8x96xf32> to vector<8x32xf32>
    %383 = arith.addf %381, %382 : vector<8x32xf32>
    %384 = arith.negf %383 : vector<8x32xf32>
    %385 = math.exp %384 : vector<8x32xf32>
    %cst_99 = arith.constant 1.000000e+00 : f32
    %386 = vector.broadcast %cst_99 : f32 to vector<8x32xf32>
    %387 = arith.addf %386, %385 : vector<8x32xf32>
    %388 = arith.divf %386, %387 : vector<8x32xf32>
    %389 = vector.extract_strided_slice %367 {offsets = [0, 64], sizes = [8, 32], strides = [1, 1]} : vector<8x192xf32> to vector<8x32xf32>
    %390 = vector.extract_strided_slice %371 {offsets = [0, 64], sizes = [8, 32], strides = [1, 1]} : vector<8x96xf32> to vector<8x32xf32>
    %391 = arith.addf %390, %4 : vector<8x32xf32>
    %392 = arith.mulf %380, %391 : vector<8x32xf32>
    %393 = arith.addf %389, %392 : vector<8x32xf32>
    %394 = math.tanh %393 : vector<8x32xf32>
    %cst_100 = arith.constant 1.000000e+00 : f32
    %395 = vector.broadcast %cst_100 : f32 to vector<8x32xf32>
    %396 = arith.subf %395, %388 : vector<8x32xf32>
    %397 = arith.mulf %396, %394 : vector<8x32xf32>
    %398 = arith.mulf %388, %328 : vector<8x32xf32>
    %399 = arith.addf %397, %398 : vector<8x32xf32>
    %400 = vector.extract_strided_slice %370 {offsets = [0, 96], sizes = [8, 32], strides = [1, 1]} : vector<8x192xf32> to vector<8x32xf32>
    %401 = vector.extract_strided_slice %372 {offsets = [0, 0], sizes = [8, 32], strides = [1, 1]} : vector<8x96xf32> to vector<8x32xf32>
    %402 = arith.addf %400, %401 : vector<8x32xf32>
    %403 = arith.negf %402 : vector<8x32xf32>
    %404 = math.exp %403 : vector<8x32xf32>
    %cst_101 = arith.constant 1.000000e+00 : f32
    %405 = vector.broadcast %cst_101 : f32 to vector<8x32xf32>
    %406 = arith.addf %405, %404 : vector<8x32xf32>
    %407 = arith.divf %405, %406 : vector<8x32xf32>
    %408 = vector.extract_strided_slice %370 {offsets = [0, 128], sizes = [8, 32], strides = [1, 1]} : vector<8x192xf32> to vector<8x32xf32>
    %409 = vector.extract_strided_slice %372 {offsets = [0, 32], sizes = [8, 32], strides = [1, 1]} : vector<8x96xf32> to vector<8x32xf32>
    %410 = arith.addf %408, %409 : vector<8x32xf32>
    %411 = arith.negf %410 : vector<8x32xf32>
    %412 = math.exp %411 : vector<8x32xf32>
    %cst_102 = arith.constant 1.000000e+00 : f32
    %413 = vector.broadcast %cst_102 : f32 to vector<8x32xf32>
    %414 = arith.addf %413, %412 : vector<8x32xf32>
    %415 = arith.divf %413, %414 : vector<8x32xf32>
    %416 = vector.extract_strided_slice %370 {offsets = [0, 160], sizes = [8, 32], strides = [1, 1]} : vector<8x192xf32> to vector<8x32xf32>
    %417 = vector.extract_strided_slice %372 {offsets = [0, 64], sizes = [8, 32], strides = [1, 1]} : vector<8x96xf32> to vector<8x32xf32>
    %418 = arith.addf %417, %7 : vector<8x32xf32>
    %419 = arith.mulf %407, %418 : vector<8x32xf32>
    %420 = arith.addf %416, %419 : vector<8x32xf32>
    %421 = math.tanh %420 : vector<8x32xf32>
    %cst_103 = arith.constant 1.000000e+00 : f32
    %422 = vector.broadcast %cst_103 : f32 to vector<8x32xf32>
    %423 = arith.subf %422, %415 : vector<8x32xf32>
    %424 = arith.mulf %423, %421 : vector<8x32xf32>
    %425 = arith.mulf %415, %355 : vector<8x32xf32>
    %426 = arith.addf %424, %425 : vector<8x32xf32>
    %427 = arith.index_cast %c5_i32 : i32 to index
    %c0_104 = arith.constant 0 : index
    %c0_105 = arith.constant 0 : index
    %428 = vector.load %arg5[%427, %c0_104, %c0_105] : memref<8x8x32xf32, #tpu.memory_space<vmem>>, vector<1x8x32xf32>
    %429 = vector.shape_cast %428 : vector<1x8x32xf32> to vector<8x32xf32>
    %430 = vector.shape_cast %399 : vector<8x32xf32> to vector<1x8x32xf32>
    tpu.vector_store %arg5[%427, %c0_104, %c0_105], %430 {strides = array<i32>} : memref<8x8x32xf32, #tpu.memory_space<vmem>>, vector<1x8x32xf32>,
    %431 = arith.index_cast %364 : i32 to index
    %c0_106 = arith.constant 0 : index
    %c0_107 = arith.constant 0 : index
    %432 = vector.load %arg6[%431, %c0_106, %c0_107] : memref<8x8x32xf32, #tpu.memory_space<vmem>>, vector<1x8x32xf32>
    %433 = vector.shape_cast %432 : vector<1x8x32xf32> to vector<8x32xf32>
    %434 = vector.shape_cast %426 : vector<8x32xf32> to vector<1x8x32xf32>
    tpu.vector_store %arg6[%431, %c0_106, %c0_107], %434 {strides = array<i32>} : memref<8x8x32xf32, #tpu.memory_space<vmem>>, vector<1x8x32xf32>,
    %c6_i32 = arith.constant 6 : i32
    %c7_i32_108 = arith.constant 7 : i32
    %435 = arith.subi %c7_i32_108, %c6_i32 : i32
    %436 = arith.index_cast %c6_i32 : i32 to index
    %c0_109 = arith.constant 0 : index
    %c0_110 = arith.constant 0 : index
    %437 = vector.load %arg0[%436, %c0_109, %c0_110] : memref<8x8x192xf32, #tpu.memory_space<vmem>>, vector<1x8x192xf32>
    %438 = vector.shape_cast %437 : vector<1x8x192xf32> to vector<8x192xf32>
    %439 = arith.index_cast %435 : i32 to index
    %c0_111 = arith.constant 0 : index
    %c0_112 = arith.constant 0 : index
    %440 = vector.load %arg0[%439, %c0_111, %c0_112] : memref<8x8x192xf32, #tpu.memory_space<vmem>>, vector<1x8x192xf32>
    %441 = vector.shape_cast %440 : vector<1x8x192xf32> to vector<8x192xf32>
    %cst_113 = arith.constant dense<0.000000e+00> : vector<8x96xf32>
    %442 = tpu.matmul %399, %0, %cst_113 {dimension_numbers = #tpu.dot_dimension_numbers<[1], [0], [0], [1], [0, 0, 1, 1], [], []>} : vector<8x32xf32>, vector<32x96xf32>, vector<8x96xf32> -> vector<8x96xf32>
    %cst_114 = arith.constant dense<0.000000e+00> : vector<8x96xf32>
    %443 = tpu.matmul %426, %1, %cst_114 {dimension_numbers = #tpu.dot_dimension_numbers<[1], [0], [0], [1], [0, 0, 1, 1], [], []>} : vector<8x32xf32>, vector<32x96xf32>, vector<8x96xf32> -> vector<8x96xf32>
    %444 = vector.extract_strided_slice %438 {offsets = [0, 0], sizes = [8, 32], strides = [1, 1]} : vector<8x192xf32> to vector<8x32xf32>
    %445 = vector.extract_strided_slice %442 {offsets = [0, 0], sizes = [8, 32], strides = [1, 1]} : vector<8x96xf32> to vector<8x32xf32>
    %446 = arith.addf %444, %445 : vector<8x32xf32>
    %447 = arith.negf %446 : vector<8x32xf32>
    %448 = math.exp %447 : vector<8x32xf32>
    %cst_115 = arith.constant 1.000000e+00 : f32
    %449 = vector.broadcast %cst_115 : f32 to vector<8x32xf32>
    %450 = arith.addf %449, %448 : vector<8x32xf32>
    %451 = arith.divf %449, %450 : vector<8x32xf32>
    %452 = vector.extract_strided_slice %438 {offsets = [0, 32], sizes = [8, 32], strides = [1, 1]} : vector<8x192xf32> to vector<8x32xf32>
    %453 = vector.extract_strided_slice %442 {offsets = [0, 32], sizes = [8, 32], strides = [1, 1]} : vector<8x96xf32> to vector<8x32xf32>
    %454 = arith.addf %452, %453 : vector<8x32xf32>
    %455 = arith.negf %454 : vector<8x32xf32>
    %456 = math.exp %455 : vector<8x32xf32>
    %cst_116 = arith.constant 1.000000e+00 : f32
    %457 = vector.broadcast %cst_116 : f32 to vector<8x32xf32>
    %458 = arith.addf %457, %456 : vector<8x32xf32>
    %459 = arith.divf %457, %458 : vector<8x32xf32>
    %460 = vector.extract_strided_slice %438 {offsets = [0, 64], sizes = [8, 32], strides = [1, 1]} : vector<8x192xf32> to vector<8x32xf32>
    %461 = vector.extract_strided_slice %442 {offsets = [0, 64], sizes = [8, 32], strides = [1, 1]} : vector<8x96xf32> to vector<8x32xf32>
    %462 = arith.addf %461, %4 : vector<8x32xf32>
    %463 = arith.mulf %451, %462 : vector<8x32xf32>
    %464 = arith.addf %460, %463 : vector<8x32xf32>
    %465 = math.tanh %464 : vector<8x32xf32>
    %cst_117 = arith.constant 1.000000e+00 : f32
    %466 = vector.broadcast %cst_117 : f32 to vector<8x32xf32>
    %467 = arith.subf %466, %459 : vector<8x32xf32>
    %468 = arith.mulf %467, %465 : vector<8x32xf32>
    %469 = arith.mulf %459, %399 : vector<8x32xf32>
    %470 = arith.addf %468, %469 : vector<8x32xf32>
    %471 = vector.extract_strided_slice %441 {offsets = [0, 96], sizes = [8, 32], strides = [1, 1]} : vector<8x192xf32> to vector<8x32xf32>
    %472 = vector.extract_strided_slice %443 {offsets = [0, 0], sizes = [8, 32], strides = [1, 1]} : vector<8x96xf32> to vector<8x32xf32>
    %473 = arith.addf %471, %472 : vector<8x32xf32>
    %474 = arith.negf %473 : vector<8x32xf32>
    %475 = math.exp %474 : vector<8x32xf32>
    %cst_118 = arith.constant 1.000000e+00 : f32
    %476 = vector.broadcast %cst_118 : f32 to vector<8x32xf32>
    %477 = arith.addf %476, %475 : vector<8x32xf32>
    %478 = arith.divf %476, %477 : vector<8x32xf32>
    %479 = vector.extract_strided_slice %441 {offsets = [0, 128], sizes = [8, 32], strides = [1, 1]} : vector<8x192xf32> to vector<8x32xf32>
    %480 = vector.extract_strided_slice %443 {offsets = [0, 32], sizes = [8, 32], strides = [1, 1]} : vector<8x96xf32> to vector<8x32xf32>
    %481 = arith.addf %479, %480 : vector<8x32xf32>
    %482 = arith.negf %481 : vector<8x32xf32>
    %483 = math.exp %482 : vector<8x32xf32>
    %cst_119 = arith.constant 1.000000e+00 : f32
    %484 = vector.broadcast %cst_119 : f32 to vector<8x32xf32>
    %485 = arith.addf %484, %483 : vector<8x32xf32>
    %486 = arith.divf %484, %485 : vector<8x32xf32>
    %487 = vector.extract_strided_slice %441 {offsets = [0, 160], sizes = [8, 32], strides = [1, 1]} : vector<8x192xf32> to vector<8x32xf32>
    %488 = vector.extract_strided_slice %443 {offsets = [0, 64], sizes = [8, 32], strides = [1, 1]} : vector<8x96xf32> to vector<8x32xf32>
    %489 = arith.addf %488, %7 : vector<8x32xf32>
    %490 = arith.mulf %478, %489 : vector<8x32xf32>
    %491 = arith.addf %487, %490 : vector<8x32xf32>
    %492 = math.tanh %491 : vector<8x32xf32>
    %cst_120 = arith.constant 1.000000e+00 : f32
    %493 = vector.broadcast %cst_120 : f32 to vector<8x32xf32>
    %494 = arith.subf %493, %486 : vector<8x32xf32>
    %495 = arith.mulf %494, %492 : vector<8x32xf32>
    %496 = arith.mulf %486, %426 : vector<8x32xf32>
    %497 = arith.addf %495, %496 : vector<8x32xf32>
    %498 = arith.index_cast %c6_i32 : i32 to index
    %c0_121 = arith.constant 0 : index
    %c0_122 = arith.constant 0 : index
    %499 = vector.load %arg5[%498, %c0_121, %c0_122] : memref<8x8x32xf32, #tpu.memory_space<vmem>>, vector<1x8x32xf32>
    %500 = vector.shape_cast %499 : vector<1x8x32xf32> to vector<8x32xf32>
    %501 = vector.shape_cast %470 : vector<8x32xf32> to vector<1x8x32xf32>
    tpu.vector_store %arg5[%498, %c0_121, %c0_122], %501 {strides = array<i32>} : memref<8x8x32xf32, #tpu.memory_space<vmem>>, vector<1x8x32xf32>,
    %502 = arith.index_cast %435 : i32 to index
    %c0_123 = arith.constant 0 : index
    %c0_124 = arith.constant 0 : index
    %503 = vector.load %arg6[%502, %c0_123, %c0_124] : memref<8x8x32xf32, #tpu.memory_space<vmem>>, vector<1x8x32xf32>
    %504 = vector.shape_cast %503 : vector<1x8x32xf32> to vector<8x32xf32>
    %505 = vector.shape_cast %497 : vector<8x32xf32> to vector<1x8x32xf32>
    tpu.vector_store %arg6[%502, %c0_123, %c0_124], %505 {strides = array<i32>} : memref<8x8x32xf32, #tpu.memory_space<vmem>>, vector<1x8x32xf32>,
    %c7_i32_125 = arith.constant 7 : i32
    %c7_i32_126 = arith.constant 7 : i32
    %506 = arith.subi %c7_i32_126, %c7_i32_125 : i32
    %507 = arith.index_cast %c7_i32_125 : i32 to index
    %c0_127 = arith.constant 0 : index
    %c0_128 = arith.constant 0 : index
    %508 = vector.load %arg0[%507, %c0_127, %c0_128] : memref<8x8x192xf32, #tpu.memory_space<vmem>>, vector<1x8x192xf32>
    %509 = vector.shape_cast %508 : vector<1x8x192xf32> to vector<8x192xf32>
    %510 = arith.index_cast %506 : i32 to index
    %c0_129 = arith.constant 0 : index
    %c0_130 = arith.constant 0 : index
    %511 = vector.load %arg0[%510, %c0_129, %c0_130] : memref<8x8x192xf32, #tpu.memory_space<vmem>>, vector<1x8x192xf32>
    %512 = vector.shape_cast %511 : vector<1x8x192xf32> to vector<8x192xf32>
    %cst_131 = arith.constant dense<0.000000e+00> : vector<8x96xf32>
    %513 = tpu.matmul %470, %0, %cst_131 {dimension_numbers = #tpu.dot_dimension_numbers<[1], [0], [0], [1], [0, 0, 1, 1], [], []>} : vector<8x32xf32>, vector<32x96xf32>, vector<8x96xf32> -> vector<8x96xf32>
    %cst_132 = arith.constant dense<0.000000e+00> : vector<8x96xf32>
    %514 = tpu.matmul %497, %1, %cst_132 {dimension_numbers = #tpu.dot_dimension_numbers<[1], [0], [0], [1], [0, 0, 1, 1], [], []>} : vector<8x32xf32>, vector<32x96xf32>, vector<8x96xf32> -> vector<8x96xf32>
    %515 = vector.extract_strided_slice %509 {offsets = [0, 0], sizes = [8, 32], strides = [1, 1]} : vector<8x192xf32> to vector<8x32xf32>
    %516 = vector.extract_strided_slice %513 {offsets = [0, 0], sizes = [8, 32], strides = [1, 1]} : vector<8x96xf32> to vector<8x32xf32>
    %517 = arith.addf %515, %516 : vector<8x32xf32>
    %518 = arith.negf %517 : vector<8x32xf32>
    %519 = math.exp %518 : vector<8x32xf32>
    %cst_133 = arith.constant 1.000000e+00 : f32
    %520 = vector.broadcast %cst_133 : f32 to vector<8x32xf32>
    %521 = arith.addf %520, %519 : vector<8x32xf32>
    %522 = arith.divf %520, %521 : vector<8x32xf32>
    %523 = vector.extract_strided_slice %509 {offsets = [0, 32], sizes = [8, 32], strides = [1, 1]} : vector<8x192xf32> to vector<8x32xf32>
    %524 = vector.extract_strided_slice %513 {offsets = [0, 32], sizes = [8, 32], strides = [1, 1]} : vector<8x96xf32> to vector<8x32xf32>
    %525 = arith.addf %523, %524 : vector<8x32xf32>
    %526 = arith.negf %525 : vector<8x32xf32>
    %527 = math.exp %526 : vector<8x32xf32>
    %cst_134 = arith.constant 1.000000e+00 : f32
    %528 = vector.broadcast %cst_134 : f32 to vector<8x32xf32>
    %529 = arith.addf %528, %527 : vector<8x32xf32>
    %530 = arith.divf %528, %529 : vector<8x32xf32>
    %531 = vector.extract_strided_slice %509 {offsets = [0, 64], sizes = [8, 32], strides = [1, 1]} : vector<8x192xf32> to vector<8x32xf32>
    %532 = vector.extract_strided_slice %513 {offsets = [0, 64], sizes = [8, 32], strides = [1, 1]} : vector<8x96xf32> to vector<8x32xf32>
    %533 = arith.addf %532, %4 : vector<8x32xf32>
    %534 = arith.mulf %522, %533 : vector<8x32xf32>
    %535 = arith.addf %531, %534 : vector<8x32xf32>
    %536 = math.tanh %535 : vector<8x32xf32>
    %cst_135 = arith.constant 1.000000e+00 : f32
    %537 = vector.broadcast %cst_135 : f32 to vector<8x32xf32>
    %538 = arith.subf %537, %530 : vector<8x32xf32>
    %539 = arith.mulf %538, %536 : vector<8x32xf32>
    %540 = arith.mulf %530, %470 : vector<8x32xf32>
    %541 = arith.addf %539, %540 : vector<8x32xf32>
    %542 = vector.extract_strided_slice %512 {offsets = [0, 96], sizes = [8, 32], strides = [1, 1]} : vector<8x192xf32> to vector<8x32xf32>
    %543 = vector.extract_strided_slice %514 {offsets = [0, 0], sizes = [8, 32], strides = [1, 1]} : vector<8x96xf32> to vector<8x32xf32>
    %544 = arith.addf %542, %543 : vector<8x32xf32>
    %545 = arith.negf %544 : vector<8x32xf32>
    %546 = math.exp %545 : vector<8x32xf32>
    %cst_136 = arith.constant 1.000000e+00 : f32
    %547 = vector.broadcast %cst_136 : f32 to vector<8x32xf32>
    %548 = arith.addf %547, %546 : vector<8x32xf32>
    %549 = arith.divf %547, %548 : vector<8x32xf32>
    %550 = vector.extract_strided_slice %512 {offsets = [0, 128], sizes = [8, 32], strides = [1, 1]} : vector<8x192xf32> to vector<8x32xf32>
    %551 = vector.extract_strided_slice %514 {offsets = [0, 32], sizes = [8, 32], strides = [1, 1]} : vector<8x96xf32> to vector<8x32xf32>
    %552 = arith.addf %550, %551 : vector<8x32xf32>
    %553 = arith.negf %552 : vector<8x32xf32>
    %554 = math.exp %553 : vector<8x32xf32>
    %cst_137 = arith.constant 1.000000e+00 : f32
    %555 = vector.broadcast %cst_137 : f32 to vector<8x32xf32>
    %556 = arith.addf %555, %554 : vector<8x32xf32>
    %557 = arith.divf %555, %556 : vector<8x32xf32>
    %558 = vector.extract_strided_slice %512 {offsets = [0, 160], sizes = [8, 32], strides = [1, 1]} : vector<8x192xf32> to vector<8x32xf32>
    %559 = vector.extract_strided_slice %514 {offsets = [0, 64], sizes = [8, 32], strides = [1, 1]} : vector<8x96xf32> to vector<8x32xf32>
    %560 = arith.addf %559, %7 : vector<8x32xf32>
    %561 = arith.mulf %549, %560 : vector<8x32xf32>
    %562 = arith.addf %558, %561 : vector<8x32xf32>
    %563 = math.tanh %562 : vector<8x32xf32>
    %cst_138 = arith.constant 1.000000e+00 : f32
    %564 = vector.broadcast %cst_138 : f32 to vector<8x32xf32>
    %565 = arith.subf %564, %557 : vector<8x32xf32>
    %566 = arith.mulf %565, %563 : vector<8x32xf32>
    %567 = arith.mulf %557, %497 : vector<8x32xf32>
    %568 = arith.addf %566, %567 : vector<8x32xf32>
    %569 = arith.index_cast %c7_i32_125 : i32 to index
    %c0_139 = arith.constant 0 : index
    %c0_140 = arith.constant 0 : index
    %570 = vector.load %arg5[%569, %c0_139, %c0_140] : memref<8x8x32xf32, #tpu.memory_space<vmem>>, vector<1x8x32xf32>
    %571 = vector.shape_cast %570 : vector<1x8x32xf32> to vector<8x32xf32>
    %572 = vector.shape_cast %541 : vector<8x32xf32> to vector<1x8x32xf32>
    tpu.vector_store %arg5[%569, %c0_139, %c0_140], %572 {strides = array<i32>} : memref<8x8x32xf32, #tpu.memory_space<vmem>>, vector<1x8x32xf32>,
    %573 = arith.index_cast %506 : i32 to index
    %c0_141 = arith.constant 0 : index
    %c0_142 = arith.constant 0 : index
    %574 = vector.load %arg6[%573, %c0_141, %c0_142] : memref<8x8x32xf32, #tpu.memory_space<vmem>>, vector<1x8x32xf32>
    %575 = vector.shape_cast %574 : vector<1x8x32xf32> to vector<8x32xf32>
    %576 = vector.shape_cast %568 : vector<8x32xf32> to vector<1x8x32xf32>
    tpu.vector_store %arg6[%573, %c0_141, %c0_142], %576 {strides = array<i32>} : memref<8x8x32xf32, #tpu.memory_space<vmem>>, vector<1x8x32xf32>,
    %c8_i32 = arith.constant 8 : i32
    return
  }
}

</mosaic_0001>

<llo_original>
// kernel: _bigru_forward.1
$region0: #{_bigru_forward.1}
  #allocation0 [shape = 'u32[]', space=smem, size = 0x4, offset = 0x4, fixed_abs, tag = 'smem constant byte address 0x4 - core index']
  #allocation1 [shape = 'u32[144,128]{1,0:T(1,128)}', space=vmem, size = 0x12000, scoped, tag = 'internal scratch']
  %s0 = inlined_call_operand.vmem [shape: f32[8,8,192], index: 0, kind: input, shape index: {}]
  %s1 = inlined_call_operand.vmem [shape: f32[32,96], index: 1, kind: input, shape index: {}]
  %s2 = inlined_call_operand.vmem [shape: f32[32,96], index: 2, kind: input, shape index: {}]
  %s3 = inlined_call_operand.vmem [shape: f32[1,32], index: 3, kind: input, shape index: {}]
  %s4 = inlined_call_operand.vmem [shape: f32[1,32], index: 4, kind: input, shape index: {}]
  %s5 = inlined_call_operand.vmem [shape: f32[8,8,32], index: 5, kind: output, shape index: {0}]
  %s6 = inlined_call_operand.vmem [shape: f32[8,8,32], index: 6, kind: output, shape index: {1}]
  %7 = xla_tuple %s5, %s6
  %s8 = sld [smem:[#allocation0]]
  $region38: #{_bigru_forward.1} parent=0
    _
  %s10 = ssub.s32 1, %s8
  %s11 = scalar_select 0, %s10, %s8
  // Predicated region
  $region2: #{_bigru_forward.1} parent=0 // pred_check
    _
  $region3: #{_bigru_forward.1} parent=0 // pred_check_branch
    %13 = sbr.rel (0) target = $region5
  $region4: #{_bigru_forward.1} parent=0 // pred_region
    _
  $region5: #{_bigru_forward.1} parent=0 // pred_fallthru
    _
  // Predicated region
  $region6: #{_bigru_forward.1} parent=0 // pred_check
    _
  $region7: #{_bigru_forward.1} parent=0 // pred_check_branch
    %15 = sbr.rel (0) target = $region9
  $region8: #{_bigru_forward.1} parent=0 // pred_region
    _
  $region9: #{_bigru_forward.1} parent=0 // pred_fallthru
    _
  // Predicated region
  $region10: #{_bigru_forward.1} parent=0 // pred_check
    _
  $region11: #{_bigru_forward.1} parent=0 // pred_check_branch
    %17 = sbr.rel (0) target = $region13
  $region12: #{_bigru_forward.1} parent=0 // pred_region
    _
  $region13: #{_bigru_forward.1} parent=0 // pred_fallthru
    _
  // Predicated region
  $region14: #{_bigru_forward.1} parent=0 // pred_check
    _
  $region15: #{_bigru_forward.1} parent=0 // pred_check_branch
    %19 = sbr.rel (0) target = $region17
  $region16: #{_bigru_forward.1} parent=0 // pred_region
    _
  $region17: #{_bigru_forward.1} parent=0 // pred_fallthru
    _
  // Predicated region
  $region18: #{_bigru_forward.1} parent=0 // pred_check
    _
  $region19: #{_bigru_forward.1} parent=0 // pred_check_branch
    %21 = sbr.rel (0) target = $region21
  $region20: #{_bigru_forward.1} parent=0 // pred_region
    _
  $region21: #{_bigru_forward.1} parent=0 // pred_fallthru
    _
  %v22 = vld [vmem:[%s1] sm:$0xff]
  %v23 = vld [vmem:[%s1 + $0x8] sm:$0xff]
  %v24 = vld [vmem:[%s1 + $0x10] sm:$0xff]
  %v25 = vld [vmem:[%s1 + $0x18] sm:$0xff]
  %v26 = vld [vmem:[%s2] sm:$0xff]
  %v27 = vld [vmem:[%s2 + $0x8] sm:$0xff]
  %v28 = vld [vmem:[%s2 + $0x10] sm:$0xff]
  %v29 = vld [vmem:[%s2 + $0x18] sm:$0xff]
  %v30 = vld [vmem:[%s3] sm:$0x1]
  %v32 = vlaneseq
  %v33 = vshrl.u32 %v32, 7
  %v34 = vsub.s32 0, %v33
  %v35 = vrot.slane %v30, %v34
  %v36 = vld [vmem:[%s4] sm:$0x1]
  %v38 = vlaneseq
  %v39 = vshrl.u32 %v38, 7
  %v40 = vsub.s32 0, %v39
  %v41 = vrot.slane %v36, %v40
  %v42 = vld [vmem:[%s0] sm:$0xff]
  %s43 = scalar_lea.vmem %s0, 112
  %v44 = vld [vmem:[%s43] sm:$0xff]
  %v45 = vld [vmem:[%s43 + $0x8] sm:$0xff]
  %vm46 = vcmask 261120
  %v48 = vsel %vm46, 0.0, 0
  %50 = vmatprep.subr.mxu0 0.0
  %51 = vmatpush1.msra.mxu0 %v22
  %52 = vmatprep.subr.mxu0 0.0
  %53 = vmatpush1.msra.mxu0 %v23
  %54 = vmatprep.subr.mxu0 0.0
  %55 = vmatpush1.msra.mxu0 %v24
  %56 = vmatprep.subr.mxu0 0.0
  %57 = vmatpush1.msra.mxu0 %v25
  %58 = vmatprep.subr.mxu0 0.0
  %59 = vmatpush1.msra.mxu0 0.0
  %60 = vmatprep.subr.mxu0 0.0
  %61 = vmatpush1.msra.mxu0 0.0
  %62 = vmatprep.subr.mxu0 0.0
  %63 = vmatpush1.msra.mxu0 0.0
  %64 = vmatprep.subr.mxu0 0.0
  %65 = vmatpush1.msra.mxu0 0.0
  %66 = vmatprep.subr.mxu0 0.0
  %67 = vmatpush1.msra.mxu0 0.0
  %68 = vmatprep.subr.mxu0 0.0
  %69 = vmatpush1.msra.mxu0 0.0
  %70 = vmatprep.subr.mxu0 0.0
  %71 = vmatpush1.msra.mxu0 0.0
  %72 = vmatprep.subr.mxu0 0.0
  %73 = vmatpush1.msra.mxu0 0.0
  %74 = vmatprep.subr.mxu0 0.0
  %75 = vmatpush1.msra.mxu0 0.0
  %76 = vmatprep.subr.mxu0 0.0
  %77 = vmatpush1.msra.mxu0 0.0
  %78 = vmatprep.subr.mxu0 0.0
  %79 = vmatpush1.msra.mxu0 0.0
  %80 = vmatprep.subr.mxu0 0.0
  %81 = vmatpush1.msra.mxu0 0.0
  %82 = vmatprep.subr.mxu0 0.0
  %83 = vmatpush1.msra.mxu0 0.0
  %84 = vmatprep.subr.mxu0 0.0
  %85 = vmatpush1.msra.mxu0 0.0
  %86 = vmatprep.subr.mxu0 0.0
  %87 = vmatpush1.msra.mxu0 0.0
  %88 = vmatprep.subr.mxu0 0.0
  %89 = vmatpush1.msra.mxu0 0.0
  %90 = vmatprep.subr.mxu0 0.0
  %91 = vmatpush1.msra.mxu0 0.0
  %92 = vmatprep.subr.mxu0 0.0
  %93 = vmatpush1.msra.mxu0 0.0
  %94 = vmatprep.subr.mxu0 0.0
  %95 = vmatpush1.msra.mxu0 0.0
  %96 = vmatprep.subr.mxu0 0.0
  %97 = vmatpush1.msra.mxu0 0.0
  %98 = vmatprep.subr.mxu0 0.0
  %99 = vmatpush1.msra.mxu0 0.0
  %100 = vmatprep.subr.mxu0 0.0
  %101 = vmatpush1.msra.mxu0 0.0
  %102 = vmatprep.subr.mxu0 0.0
  %103 = vmatpush1.msra.mxu0 0.0
  %104 = vmatprep.subr.mxu0 0.0
  %105 = vmatpush1.msra.mxu0 0.0
  %106 = vmatprep.subr.mxu0 0.0
  %107 = vmatpush1.msra.mxu0 0.0
  %108 = vmatprep.subr.mxu0 0.0
  %109 = vmatpush1.msra.mxu0 0.0
  %110 = vmatprep.subr.mxu0 0.0
  %111 = vmatpush1.msra.mxu0 0.0
  %112 = vmatprep.subr.mxu0 0.0
  %113 = vmatpush1.msra.mxu0 0.0
  %114 = vmatprep.mubr.f32.mxu0 0.0
  %115 = vmatmul.mubr.f32.gmra.mrb[0].mxu0 %v48
  %v116 = vpop.f32.mrb[0].mxu0
  %v117 = vadd.f32 0.0, %v116
  %v118 = vpop.f32.mrb[0].mxu0
  %119 = vdwg.mxu0
  %120 = vmatprep.subr.mxu0 0.0
  %121 = vmatpush1.msra.mxu0 %v26
  %122 = vmatprep.subr.mxu0 0.0
  %123 = vmatpush1.msra.mxu0 %v27
  %124 = vmatprep.subr.mxu0 0.0
  %125 = vmatpush1.msra.mxu0 %v28
  %126 = vmatprep.subr.mxu0 0.0
  %127 = vmatpush1.msra.mxu0 %v29
  %128 = vmatprep.subr.mxu0 0.0
  %129 = vmatpush1.msra.mxu0 0.0
  %130 = vmatprep.subr.mxu0 0.0
  %131 = vmatpush1.msra.mxu0 0.0
  %132 = vmatprep.subr.mxu0 0.0
  %133 = vmatpush1.msra.mxu0 0.0
  %134 = vmatprep.subr.mxu0 0.0
  %135 = vmatpush1.msra.mxu0 0.0
  %136 = vmatprep.subr.mxu0 0.0
  %137 = vmatpush1.msra.mxu0 0.0
  %138 = vmatprep.subr.mxu0 0.0
  %139 = vmatpush1.msra.mxu0 0.0
  %140 = vmatprep.subr.mxu0 0.0
  %141 = vmatpush1.msra.mxu0 0.0
  %142 = vmatprep.subr.mxu0 0.0
  %143 = vmatpush1.msra.mxu0 0.0
  %144 = vmatprep.subr.mxu0 0.0
  %145 = vmatpush1.msra.mxu0 0.0
  %146 = vmatprep.subr.mxu0 0.0
  %147 = vmatpush1.msra.mxu0 0.0
  %148 = vmatprep.subr.mxu0 0.0
  %149 = vmatpush1.msra.mxu0 0.0
  %150 = vmatprep.subr.mxu0 0.0
  %151 = vmatpush1.msra.mxu0 0.0
  %152 = vmatprep.subr.mxu0 0.0
  %153 = vmatpush1.msra.mxu0 0.0
  %154 = vmatprep.subr.mxu0 0.0
  %155 = vmatpush1.msra.mxu0 0.0
  %156 = vmatprep.subr.mxu0 0.0
  %157 = vmatpush1.msra.mxu0 0.0
  %158 = vmatprep.subr.mxu0 0.0
  %159 = vmatpush1.msra.mxu0 0.0
  %160 = vmatprep.subr.mxu0 0.0
  %161 = vmatpush1.msra.mxu0 0.0
  %162 = vmatprep.subr.mxu0 0.0
  %163 = vmatpush1.msra.mxu0 0.0
  %164 = vmatprep.subr.mxu0 0.0
  %165 = vmatpush1.msra.mxu0 0.0
  %166 = vmatprep.subr.mxu0 0.0
  %167 = vmatpush1.msra.mxu0 0.0
  %168 = vmatprep.subr.mxu0 0.0
  %169 = vmatpush1.msra.mxu0 0.0
  %170 = vmatprep.subr.mxu0 0.0
  %171 = vmatpush1.msra.mxu0 0.0
  %172 = vmatprep.subr.mxu0 0.0
  %173 = vmatpush1.msra.mxu0 0.0
  %174 = vmatprep.subr.mxu0 0.0
  %175 = vmatpush1.msra.mxu0 0.0
  %176 = vmatprep.subr.mxu0 0.0
  %177 = vmatpush1.msra.mxu0 0.0
  %178 = vmatprep.subr.mxu0 0.0
  %179 = vmatpush1.msra.mxu0 0.0
  %180 = vmatprep.subr.mxu0 0.0
  %181 = vmatpush1.msra.mxu0 0.0
  %182 = vmatprep.subr.mxu0 0.0
  %183 = vmatpush1.msra.mxu0 0.0
  %184 = vmatprep.mubr.f32.mxu0 0.0
  %185 = vmatmul.mubr.f32.gmra.mrb[0].mxu0 %v48
  %v186 = vpop.f32.mrb[0].mxu0
  %v187 = vadd.f32 0.0, %v186
  %v188 = vpop.f32.mrb[0].mxu0
  %189 = vdwg.mxu0
  %v190 = vadd.f32 %v42, %v117
  %v191 = vxor.u32 %v190, 2147483648
  %v192 = vmul.f32 %v191, 1.442695
  %v193 = vpow.pop %v192
  %v194 = vadd.f32 %v193, 1.0
  %v195 = vrcp.pop %v194
  %v196 = vmul.f32 1.0, %v195
  %197 = vrot.lane.b32.xlu0 %v35, 64
  %v198 = vpop.permute.xlu0 %197
  %v200 = vadd.f32 %v117, %v198
  %202 = vrot.lane.b32.xlu0 %v200, 64
  %v203 = vpop.permute.xlu0 %202
  %v205 = vmul.f32 %v196, %v203
  %207 = vrot.lane.b32.xlu0 %v205, 64
  %v208 = vpop.permute.xlu0 %207
  %v210 = vadd.f32 %v42, %v208
  %v211 = vtanh.pop %v210
  %v212 = vsub.f32 1.0, %v196
  %214 = vrot.lane.b32.xlu0 %v211, 96
  %v215 = vpop.permute.xlu0 %214
  %v217 = vmul.f32 %v212, %v215
  %v218 = vmul.f32 %v196, 0.0
  %v219 = vadd.f32 %v217, %v218
  %221 = vrot.lane.b32.xlu0 %v187, 96
  %v222 = vpop.permute.xlu0 %221
  %v224 = vadd.f32 %v44, %v222
  %v225 = vxor.u32 %v224, 2147483648
  %v226 = vmul.f32 %v225, 1.442695
  %v227 = vpow.pop %v226
  %v228 = vadd.f32 %v227, 1.0
  %v229 = vrcp.pop %v228
  %v230 = vmul.f32 1.0, %v229
  %v231 = vadd.f32 %v45, %v222
  %v232 = vxor.u32 %v231, 2147483648
  %v233 = vmul.f32 %v232, 1.442695
  %v234 = vpow.pop %v233
  %v235 = vadd.f32 %v234, 1.0
  %v236 = vrcp.pop %v235
  %v237 = vmul.f32 1.0, %v236
  %238 = vrot.lane.b32.xlu0 %v41, 64
  %v239 = vpop.permute.xlu0 %238
  %v241 = vadd.f32 %v187, %v239
  %243 = vrot.lane.b32.xlu0 %v241, 32
  %v244 = vpop.permute.xlu0 %243
  %v246 = vmul.f32 %v230, %v244
  %248 = vrot.lane.b32.xlu0 %v246, 64
  %v249 = vpop.permute.xlu0 %248
  %v251 = vadd.f32 %v45, %v249
  %v252 = vtanh.pop %v251
  %v253 = vsub.f32 1.0, %v237
  %255 = vrot.lane.b32.xlu0 %v252, 96
  %v256 = vpop.permute.xlu0 %255
  %v258 = vmul.f32 %v253, %v256
  %v259 = vmul.f32 %v237, 0.0
  %v260 = vadd.f32 %v258, %v259
  %262 = vrot.lane.b32.xlu0 %v219, 96
  %v263 = vpop.permute.xlu0 %262
  %265 = vst.msk [vmem:[%s5] sm:$0xff] %vm46, %v263
  %s266 = scalar_lea.vmem %s6, 56
  %267 = vst.msk [vmem:[%s266] sm:$0xff] %vm46, %v260
  %s268 = scalar_lea.vmem %s0, 16
  %v269 = vld [vmem:[%s268] sm:$0xff]
  %s270 = scalar_lea.vmem %s0, 96
  %v271 = vld [vmem:[%s270] sm:$0xff]
  %v272 = vld [vmem:[%s270 + $0x8] sm:$0xff]
  %v273 = vsel %vm46, %v263, 0
  %275 = vmatprep.subr.mxu0 0.0
  %276 = vmatpush1.msra.mxu0 %v22
  %277 = vmatprep.subr.mxu0 0.0
  %278 = vmatpush1.msra.mxu0 %v23
  %279 = vmatprep.subr.mxu0 0.0
  %280 = vmatpush1.msra.mxu0 %v24
  %281 = vmatprep.subr.mxu0 0.0
  %282 = vmatpush1.msra.mxu0 %v25
  %283 = vmatprep.subr.mxu0 0.0
  %284 = vmatpush1.msra.mxu0 0.0
  %285 = vmatprep.subr.mxu0 0.0
  %286 = vmatpush1.msra.mxu0 0.0
  %287 = vmatprep.subr.mxu0 0.0
  %288 = vmatpush1.msra.mxu0 0.0
  %289 = vmatprep.subr.mxu0 0.0
  %290 = vmatpush1.msra.mxu0 0.0
  %291 = vmatprep.subr.mxu0 0.0
  %292 = vmatpush1.msra.mxu0 0.0
  %293 = vmatprep.subr.mxu0 0.0
  %294 = vmatpush1.msra.mxu0 0.0
  %295 = vmatprep.subr.mxu0 0.0
  %296 = vmatpush1.msra.mxu0 0.0
  %297 = vmatprep.subr.mxu0 0.0
  %298 = vmatpush1.msra.mxu0 0.0
  %299 = vmatprep.subr.mxu0 0.0
  %300 = vmatpush1.msra.mxu0 0.0
  %301 = vmatprep.subr.mxu0 0.0
  %302 = vmatpush1.msra.mxu0 0.0
  %303 = vmatprep.subr.mxu0 0.0
  %304 = vmatpush1.msra.mxu0 0.0
  %305 = vmatprep.subr.mxu0 0.0
  %306 = vmatpush1.msra.mxu0 0.0
  %307 = vmatprep.subr.mxu0 0.0
  %308 = vmatpush1.msra.mxu0 0.0
  %309 = vmatprep.subr.mxu0 0.0
  %310 = vmatpush1.msra.mxu0 0.0
  %311 = vmatprep.subr.mxu0 0.0
  %312 = vmatpush1.msra.mxu0 0.0
  %313 = vmatprep.subr.mxu0 0.0
  %314 = vmatpush1.msra.mxu0 0.0
  %315 = vmatprep.subr.mxu0 0.0
  %316 = vmatpush1.msra.mxu0 0.0
  %317 = vmatprep.subr.mxu0 0.0
  %318 = vmatpush1.msra.mxu0 0.0
  %319 = vmatprep.subr.mxu0 0.0
  %320 = vmatpush1.msra.mxu0 0.0
  %321 = vmatprep.subr.mxu0 0.0
  %322 = vmatpush1.msra.mxu0 0.0
  %323 = vmatprep.subr.mxu0 0.0
  %324 = vmatpush1.msra.mxu0 0.0
  %325 = vmatprep.subr.mxu0 0.0
  %326 = vmatpush1.msra.mxu0 0.0
  %327 = vmatprep.subr.mxu0 0.0
  %328 = vmatpush1.msra.mxu0 0.0
  %329 = vmatprep.subr.mxu0 0.0
  %330 = vmatpush1.msra.mxu0 0.0
  %331 = vmatprep.subr.mxu0 0.0
  %332 = vmatpush1.msra.mxu0 0.0
  %333 = vmatprep.subr.mxu0 0.0
  %334 = vmatpush1.msra.mxu0 0.0
  %335 = vmatprep.subr.mxu0 0.0
  %336 = vmatpush1.msra.mxu0 0.0
  %337 = vmatprep.subr.mxu0 0.0
  %338 = vmatpush1.msra.mxu0 0.0
  %339 = vmatprep.mubr.f32.mxu0 0.0
  %340 = vmatmul.mubr.f32.gmra.mrb[0].mxu0 %v273
  %v341 = vpop.f32.mrb[0].mxu0
  %v342 = vadd.f32 0.0, %v341
  %v343 = vpop.f32.mrb[0].mxu0
  %344 = vdwg.mxu0
  %v346 = vsel %vm46, %v260, 0
  %348 = vmatprep.subr.mxu0 0.0
  %349 = vmatpush1.msra.mxu0 %v26
  %350 = vmatprep.subr.mxu0 0.0
  %351 = vmatpush1.msra.mxu0 %v27
  %352 = vmatprep.subr.mxu0 0.0
  %353 = vmatpush1.msra.mxu0 %v28
  %354 = vmatprep.subr.mxu0 0.0
  %355 = vmatpush1.msra.mxu0 %v29
  %356 = vmatprep.subr.mxu0 0.0
  %357 = vmatpush1.msra.mxu0 0.0
  %358 = vmatprep.subr.mxu0 0.0
  %359 = vmatpush1.msra.mxu0 0.0
  %360 = vmatprep.subr.mxu0 0.0
  %361 = vmatpush1.msra.mxu0 0.0
  %362 = vmatprep.subr.mxu0 0.0
  %363 = vmatpush1.msra.mxu0 0.0
  %364 = vmatprep.subr.mxu0 0.0
  %365 = vmatpush1.msra.mxu0 0.0
  %366 = vmatprep.subr.mxu0 0.0
  %367 = vmatpush1.msra.mxu0 0.0
  %368 = vmatprep.subr.mxu0 0.0
  %369 = vmatpush1.msra.mxu0 0.0
  %370 = vmatprep.subr.mxu0 0.0
  %371 = vmatpush1.msra.mxu0 0.0
  %372 = vmatprep.subr.mxu0 0.0
  %373 = vmatpush1.msra.mxu0 0.0
  %374 = vmatprep.subr.mxu0 0.0
  %375 = vmatpush1.msra.mxu0 0.0
  %376 = vmatprep.subr.mxu0 0.0
  %377 = vmatpush1.msra.mxu0 0.0
  %378 = vmatprep.subr.mxu0 0.0
  %379 = vmatpush1.msra.mxu0 0.0
  %380 = vmatprep.subr.mxu0 0.0
  %381 = vmatpush1.msra.mxu0 0.0
  %382 = vmatprep.subr.mxu0 0.0
  %383 = vmatpush1.msra.mxu0 0.0
  %384 = vmatprep.subr.mxu0 0.0
  %385 = vmatpush1.msra.mxu0 0.0
  %386 = vmatprep.subr.mxu0 0.0
  %387 = vmatpush1.msra.mxu0 0.0
  %388 = vmatprep.subr.mxu0 0.0
  %389 = vmatpush1.msra.mxu0 0.0
  %390 = vmatprep.subr.mxu0 0.0
  %391 = vmatpush1.msra.mxu0 0.0
  %392 = vmatprep.subr.mxu0 0.0
  %393 = vmatpush1.msra.mxu0 0.0
  %394 = vmatprep.subr.mxu0 0.0
  %395 = vmatpush1.msra.mxu0 0.0
  %396 = vmatprep.subr.mxu0 0.0
  %397 = vmatpush1.msra.mxu0 0.0
  %398 = vmatprep.subr.mxu0 0.0
  %399 = vmatpush1.msra.mxu0 0.0
  %400 = vmatprep.subr.mxu0 0.0
  %401 = vmatpush1.msra.mxu0 0.0
  %402 = vmatprep.subr.mxu0 0.0
  %403 = vmatpush1.msra.mxu0 0.0
  %404 = vmatprep.subr.mxu0 0.0
  %405 = vmatpush1.msra.mxu0 0.0
  %406 = vmatprep.subr.mxu0 0.0
  %407 = vmatpush1.msra.mxu0 0.0
  %408 = vmatprep.subr.mxu0 0.0
  %409 = vmatpush1.msra.mxu0 0.0
  %410 = vmatprep.subr.mxu0 0.0
  %411 = vmatpush1.msra.mxu0 0.0
  %412 = vmatprep.mubr.f32.mxu0 0.0
  %413 = vmatmul.mubr.f32.gmra.mrb[0].mxu0 %v346
  %v414 = vpop.f32.mrb[0].mxu0
  %v415 = vadd.f32 0.0, %v414
  %v416 = vpop.f32.mrb[0].mxu0
  %417 = vdwg.mxu0
  %v418 = vadd.f32 %v269, %v342
  %v419 = vxor.u32 %v418, 2147483648
  %v420 = vmul.f32 %v419, 1.442695
  %v421 = vpow.pop %v420
  %v422 = vadd.f32 %v421, 1.0
  %v423 = vrcp.pop %v422
  %v424 = vmul.f32 1.0, %v423
  %v425 = vadd.f32 %v342, %v198
  %427 = vrot.lane.b32.xlu0 %v425, 64
  %v428 = vpop.permute.xlu0 %427
  %v430 = vmul.f32 %v424, %v428
  %432 = vrot.lane.b32.xlu0 %v430, 64
  %v433 = vpop.permute.xlu0 %432
  %v435 = vadd.f32 %v269, %v433
  %v436 = vtanh.pop %v435
  %v437 = vsub.f32 1.0, %v424
  %439 = vrot.lane.b32.xlu0 %v436, 96
  %v440 = vpop.permute.xlu0 %439
  %v442 = vmul.f32 %v437, %v440
  %v443 = vmul.f32 %v424, %v219
  %v444 = vadd.f32 %v442, %v443
  %446 = vrot.lane.b32.xlu0 %v415, 96
  %v447 = vpop.permute.xlu0 %446
  %v449 = vadd.f32 %v271, %v447
  %v450 = vxor.u32 %v449, 2147483648
  %v451 = vmul.f32 %v450, 1.442695
  %v452 = vpow.pop %v451
  %v453 = vadd.f32 %v452, 1.0
  %v454 = vrcp.pop %v453
  %v455 = vmul.f32 1.0, %v454
  %v456 = vadd.f32 %v272, %v447
  %v457 = vxor.u32 %v456, 2147483648
  %v458 = vmul.f32 %v457, 1.442695
  %v459 = vpow.pop %v458
  %v460 = vadd.f32 %v459, 1.0
  %v461 = vrcp.pop %v460
  %v462 = vmul.f32 1.0, %v461
  %v463 = vadd.f32 %v415, %v239
  %465 = vrot.lane.b32.xlu0 %v463, 32
  %v466 = vpop.permute.xlu0 %465
  %v468 = vmul.f32 %v455, %v466
  %470 = vrot.lane.b32.xlu0 %v468, 64
  %v471 = vpop.permute.xlu0 %470
  %v473 = vadd.f32 %v272, %v471
  %v474 = vtanh.pop %v473
  %v475 = vsub.f32 1.0, %v462
  %477 = vrot.lane.b32.xlu0 %v474, 96
  %v478 = vpop.permute.xlu0 %477
  %v480 = vmul.f32 %v475, %v478
  %v481 = vmul.f32 %v462, %v260
  %v482 = vadd.f32 %v480, %v481
  %484 = vrot.lane.b32.xlu0 %v444, 96
  %v485 = vpop.permute.xlu0 %484
  %s487 = scalar_lea.vmem %s5, 8
  %488 = vst.msk [vmem:[%s487] sm:$0xff] %vm46, %v485
  %s489 = scalar_lea.vmem %s6, 48
  %490 = vst.msk [vmem:[%s489] sm:$0xff] %vm46, %v482
  %s491 = scalar_lea.vmem %s0, 32
  %v492 = vld [vmem:[%s491] sm:$0xff]
  %s493 = scalar_lea.vmem %s0, 80
  %v494 = vld [vmem:[%s493] sm:$0xff]
  %v495 = vld [vmem:[%s493 + $0x8] sm:$0xff]
  %v496 = vsel %vm46, %v485, 0
  %498 = vmatprep.subr.mxu0 0.0
  %499 = vmatpush1.msra.mxu0 %v22
  %500 = vmatprep.subr.mxu0 0.0
  %501 = vmatpush1.msra.mxu0 %v23
  %502 = vmatprep.subr.mxu0 0.0
  %503 = vmatpush1.msra.mxu0 %v24
  %504 = vmatprep.subr.mxu0 0.0
  %505 = vmatpush1.msra.mxu0 %v25
  %506 = vmatprep.subr.mxu0 0.0
  %507 = vmatpush1.msra.mxu0 0.0
  %508 = vmatprep.subr.mxu0 0.0
  %509 = vmatpush1.msra.mxu0 0.0
  %510 = vmatprep.subr.mxu0 0.0
  %511 = vmatpush1.msra.mxu0 0.0
  %512 = vmatprep.subr.mxu0 0.0
  %513 = vmatpush1.msra.mxu0 0.0
  %514 = vmatprep.subr.mxu0 0.0
  %515 = vmatpush1.msra.mxu0 0.0
  %516 = vmatprep.subr.mxu0 0.0
  %517 = vmatpush1.msra.mxu0 0.0
  %518 = vmatprep.subr.mxu0 0.0
  %519 = vmatpush1.msra.mxu0 0.0
  %520 = vmatprep.subr.mxu0 0.0
  %521 = vmatpush1.msra.mxu0 0.0
  %522 = vmatprep.subr.mxu0 0.0
  %523 = vmatpush1.msra.mxu0 0.0
  %524 = vmatprep.subr.mxu0 0.0
  %525 = vmatpush1.msra.mxu0 0.0
  %526 = vmatprep.subr.mxu0 0.0
  %527 = vmatpush1.msra.mxu0 0.0
  %528 = vmatprep.subr.mxu0 0.0
  %529 = vmatpush1.msra.mxu0 0.0
  %530 = vmatprep.subr.mxu0 0.0
  %531 = vmatpush1.msra.mxu0 0.0
  %532 = vmatprep.subr.mxu0 0.0
  %533 = vmatpush1.msra.mxu0 0.0
  %534 = vmatprep.subr.mxu0 0.0
  %535 = vmatpush1.msra.mxu0 0.0
  %536 = vmatprep.subr.mxu0 0.0
  %537 = vmatpush1.msra.mxu0 0.0
  %538 = vmatprep.subr.mxu0 0.0
  %539 = vmatpush1.msra.mxu0 0.0
  %540 = vmatprep.subr.mxu0 0.0
  %541 = vmatpush1.msra.mxu0 0.0
  %542 = vmatprep.subr.mxu0 0.0
  %543 = vmatpush1.msra.mxu0 0.0
  %544 = vmatprep.subr.mxu0 0.0
  %545 = vmatpush1.msra.mxu0 0.0
  %546 = vmatprep.subr.mxu0 0.0
  %547 = vmatpush1.msra.mxu0 0.0
  %548 = vmatprep.subr.mxu0 0.0
  %549 = vmatpush1.msra.mxu0 0.0
  %550 = vmatprep.subr.mxu0 0.0
  %551 = vmatpush1.msra.mxu0 0.0
  %552 = vmatprep.subr.mxu0 0.0
  %553 = vmatpush1.msra.mxu0 0.0
  %554 = vmatprep.subr.mxu0 0.0
  %555 = vmatpush1.msra.mxu0 0.0
  %556 = vmatprep.subr.mxu0 0.0
  %557 = vmatpush1.msra.mxu0 0.0
  %558 = vmatprep.subr.mxu0 0.0
  %559 = vmatpush1.msra.mxu0 0.0
  %560 = vmatprep.subr.mxu0 0.0
  %561 = vmatpush1.msra.mxu0 0.0
  %562 = vmatprep.mubr.f32.mxu0 0.0
  %563 = vmatmul.mubr.f32.gmra.mrb[0].mxu0 %v496
  %v564 = vpop.f32.mrb[0].mxu0
  %v565 = vadd.f32 0.0, %v564
  %v566 = vpop.f32.mrb[0].mxu0
  %567 = vdwg.mxu0
  %v569 = vsel %vm46, %v482, 0
  %571 = vmatprep.subr.mxu0 0.0
  %572 = vmatpush1.msra.mxu0 %v26
  %573 = vmatprep.subr.mxu0 0.0
  %574 = vmatpush1.msra.mxu0 %v27
  %575 = vmatprep.subr.mxu0 0.0
  %576 = vmatpush1.msra.mxu0 %v28
  %577 = vmatprep.subr.mxu0 0.0
  %578 = vmatpush1.msra.mxu0 %v29
  %579 = vmatprep.subr.mxu0 0.0
  %580 = vmatpush1.msra.mxu0 0.0
  %581 = vmatprep.subr.mxu0 0.0
  %582 = vmatpush1.msra.mxu0 0.0
  %583 = vmatprep.subr.mxu0 0.0
  %584 = vmatpush1.msra.mxu0 0.0
  %585 = vmatprep.subr.mxu0 0.0
  %586 = vmatpush1.msra.mxu0 0.0
  %587 = vmatprep.subr.mxu0 0.0
  %588 = vmatpush1.msra.mxu0 0.0
  %589 = vmatprep.subr.mxu0 0.0
  %590 = vmatpush1.msra.mxu0 0.0
  %591 = vmatprep.subr.mxu0 0.0
  %592 = vmatpush1.msra.mxu0 0.0
  %593 = vmatprep.subr.mxu0 0.0
  %594 = vmatpush1.msra.mxu0 0.0
  %595 = vmatprep.subr.mxu0 0.0
  %596 = vmatpush1.msra.mxu0 0.0
  %597 = vmatprep.subr.mxu0 0.0
  %598 = vmatpush1.msra.mxu0 0.0
  %599 = vmatprep.subr.mxu0 0.0
  %600 = vmatpush1.msra.mxu0 0.0
  %601 = vmatprep.subr.mxu0 0.0
  %602 = vmatpush1.msra.mxu0 0.0
  %603 = vmatprep.subr.mxu0 0.0
  %604 = vmatpush1.msra.mxu0 0.0
  %605 = vmatprep.subr.mxu0 0.0
  %606 = vmatpush1.msra.mxu0 0.0
  %607 = vmatprep.subr.mxu0 0.0
  %608 = vmatpush1.msra.mxu0 0.0
  %609 = vmatprep.subr.mxu0 0.0
  %610 = vmatpush1.msra.mxu0 0.0
  %611 = vmatprep.subr.mxu0 0.0
  %612 = vmatpush1.msra.mxu0 0.0
  %613 = vmatprep.subr.mxu0 0.0
  %614 = vmatpush1.msra.mxu0 0.0
  %615 = vmatprep.subr.mxu0 0.0
  %616 = vmatpush1.msra.mxu0 0.0
  %617 = vmatprep.subr.mxu0 0.0
  %618 = vmatpush1.msra.mxu0 0.0
  %619 = vmatprep.subr.mxu0 0.0
  %620 = vmatpush1.msra.mxu0 0.0
  %621 = vmatprep.subr.mxu0 0.0
  %622 = vmatpush1.msra.mxu0 0.0
  %623 = vmatprep.subr.mxu0 0.0
  %624 = vmatpush1.msra.mxu0 0.0
  %625 = vmatprep.subr.mxu0 0.0
  %626 = vmatpush1.msra.mxu0 0.0
  %627 = vmatprep.subr.mxu0 0.0
  %628 = vmatpush1.msra.mxu0 0.0
  %629 = vmatprep.subr.mxu0 0.0
  %630 = vmatpush1.msra.mxu0 0.0
  %631 = vmatprep.subr.mxu0 0.0
  %632 = vmatpush1.msra.mxu0 0.0
  %633 = vmatprep.subr.mxu0 0.0
  %634 = vmatpush1.msra.mxu0 0.0
  %635 = vmatprep.mubr.f32.mxu0 0.0
  %636 = vmatmul.mubr.f32.gmra.mrb[0].mxu0 %v569
  %v637 = vpop.f32.mrb[0].mxu0
  %v638 = vadd.f32 0.0, %v637
  %v639 = vpop.f32.mrb[0].mxu0
  %640 = vdwg.mxu0
  %v641 = vadd.f32 %v492, %v565
  %v642 = vxor.u32 %v641, 2147483648
  %v643 = vmul.f32 %v642, 1.442695
  %v644 = vpow.pop %v643
  %v645 = vadd.f32 %v644, 1.0
  %v646 = vrcp.pop %v645
  %v647 = vmul.f32 1.0, %v646
  %v648 = vadd.f32 %v565, %v198
  %650 = vrot.lane.b32.xlu0 %v648, 64
  %v651 = vpop.permute.xlu0 %650
  %v653 = vmul.f32 %v647, %v651
  %655 = vrot.lane.b32.xlu0 %v653, 64
  %v656 = vpop.permute.xlu0 %655
  %v658 = vadd.f32 %v492, %v656
  %v659 = vtanh.pop %v658
  %v660 = vsub.f32 1.0, %v647
  %662 = vrot.lane.b32.xlu0 %v659, 96
  %v663 = vpop.permute.xlu0 %662
  %v665 = vmul.f32 %v660, %v663
  %v666 = vmul.f32 %v647, %v444
  %v667 = vadd.f32 %v665, %v666
  %669 = vrot.lane.b32.xlu0 %v638, 96
  %v670 = vpop.permute.xlu0 %669
  %v672 = vadd.f32 %v494, %v670
  %v673 = vxor.u32 %v672, 2147483648
  %v674 = vmul.f32 %v673, 1.442695
  %v675 = vpow.pop %v674
  %v676 = vadd.f32 %v675, 1.0
  %v677 = vrcp.pop %v676
  %v678 = vmul.f32 1.0, %v677
  %v679 = vadd.f32 %v495, %v670
  %v680 = vxor.u32 %v679, 2147483648
  %v681 = vmul.f32 %v680, 1.442695
  %v682 = vpow.pop %v681
  %v683 = vadd.f32 %v682, 1.0
  %v684 = vrcp.pop %v683
  %v685 = vmul.f32 1.0, %v684
  %v686 = vadd.f32 %v638, %v239
  %688 = vrot.lane.b32.xlu0 %v686, 32
  %v689 = vpop.permute.xlu0 %688
  %v691 = vmul.f32 %v678, %v689
  %693 = vrot.lane.b32.xlu0 %v691, 64
  %v694 = vpop.permute.xlu0 %693
  %v696 = vadd.f32 %v495, %v694
  %v697 = vtanh.pop %v696
  %v698 = vsub.f32 1.0, %v685
  %700 = vrot.lane.b32.xlu0 %v697, 96
  %v701 = vpop.permute.xlu0 %700
  %v703 = vmul.f32 %v698, %v701
  %v704 = vmul.f32 %v685, %v482
  %v705 = vadd.f32 %v703, %v704
  %707 = vrot.lane.b32.xlu0 %v667, 96
  %v708 = vpop.permute.xlu0 %707
  %s710 = scalar_lea.vmem %s5, 16
  %711 = vst.msk [vmem:[%s710] sm:$0xff] %vm46, %v708
  %s712 = scalar_lea.vmem %s6, 40
  %713 = vst.msk [vmem:[%s712] sm:$0xff] %vm46, %v705
  %s714 = scalar_lea.vmem %s0, 48
  %v715 = vld [vmem:[%s714] sm:$0xff]
  %s716 = scalar_lea.vmem %s0, 64
  %v717 = vld [vmem:[%s716] sm:$0xff]
  %v718 = vld [vmem:[%s716 + $0x8] sm:$0xff]
  %v719 = vsel %vm46, %v708, 0
  %721 = vmatprep.subr.mxu0 0.0
  %722 = vmatpush1.msra.mxu0 %v22
  %723 = vmatprep.subr.mxu0 0.0
  %724 = vmatpush1.msra.mxu0 %v23
  %725 = vmatprep.subr.mxu0 0.0
  %726 = vmatpush1.msra.mxu0 %v24
  %727 = vmatprep.subr.mxu0 0.0
  %728 = vmatpush1.msra.mxu0 %v25
  %729 = vmatprep.subr.mxu0 0.0
  %730 = vmatpush1.msra.mxu0 0.0
  %731 = vmatprep.subr.mxu0 0.0
  %732 = vmatpush1.msra.mxu0 0.0
  %733 = vmatprep.subr.mxu0 0.0
  %734 = vmatpush1.msra.mxu0 0.0
  %735 = vmatprep.subr.mxu0 0.0
  %736 = vmatpush1.msra.mxu0 0.0
  %737 = vmatprep.subr.mxu0 0.0
  %738 = vmatpush1.msra.mxu0 0.0
  %739 = vmatprep.subr.mxu0 0.0
  %740 = vmatpush1.msra.mxu0 0.0
  %741 = vmatprep.subr.mxu0 0.0
  %742 = vmatpush1.msra.mxu0 0.0
  %743 = vmatprep.subr.mxu0 0.0
  %744 = vmatpush1.msra.mxu0 0.0
  %745 = vmatprep.subr.mxu0 0.0
  %746 = vmatpush1.msra.mxu0 0.0
  %747 = vmatprep.subr.mxu0 0.0
  %748 = vmatpush1.msra.mxu0 0.0
  %749 = vmatprep.subr.mxu0 0.0
  %750 = vmatpush1.msra.mxu0 0.0
  %751 = vmatprep.subr.mxu0 0.0
  %752 = vmatpush1.msra.mxu0 0.0
  %753 = vmatprep.subr.mxu0 0.0
  %754 = vmatpush1.msra.mxu0 0.0
  %755 = vmatprep.subr.mxu0 0.0
  %756 = vmatpush1.msra.mxu0 0.0
  %757 = vmatprep.subr.mxu0 0.0
  %758 = vmatpush1.msra.mxu0 0.0
  %759 = vmatprep.subr.mxu0 0.0
  %760 = vmatpush1.msra.mxu0 0.0
  %761 = vmatprep.subr.mxu0 0.0
  %762 = vmatpush1.msra.mxu0 0.0
  %763 = vmatprep.subr.mxu0 0.0
  %764 = vmatpush1.msra.mxu0 0.0
  %765 = vmatprep.subr.mxu0 0.0
  %766 = vmatpush1.msra.mxu0 0.0
  %767 = vmatprep.subr.mxu0 0.0
  %768 = vmatpush1.msra.mxu0 0.0
  %769 = vmatprep.subr.mxu0 0.0
  %770 = vmatpush1.msra.mxu0 0.0
  %771 = vmatprep.subr.mxu0 0.0
  %772 = vmatpush1.msra.mxu0 0.0
  %773 = vmatprep.subr.mxu0 0.0
  %774 = vmatpush1.msra.mxu0 0.0
  %775 = vmatprep.subr.mxu0 0.0
  %776 = vmatpush1.msra.mxu0 0.0
  %777 = vmatprep.subr.mxu0 0.0
  %778 = vmatpush1.msra.mxu0 0.0
  %779 = vmatprep.subr.mxu0 0.0
  %780 = vmatpush1.msra.mxu0 0.0
  %781 = vmatprep.subr.mxu0 0.0
  %782 = vmatpush1.msra.mxu0 0.0
  %783 = vmatprep.subr.mxu0 0.0
  %784 = vmatpush1.msra.mxu0 0.0
  %785 = vmatprep.mubr.f32.mxu0 0.0
  %786 = vmatmul.mubr.f32.gmra.mrb[0].mxu0 %v719
  %v787 = vpop.f32.mrb[0].mxu0
  %v788 = vadd.f32 0.0, %v787
  %v789 = vpop.f32.mrb[0].mxu0
  %790 = vdwg.mxu0
  %v792 = vsel %vm46, %v705, 0
  %794 = vmatprep.subr.mxu0 0.0
  %795 = vmatpush1.msra.mxu0 %v26
  %796 = vmatprep.subr.mxu0 0.0
  %797 = vmatpush1.msra.mxu0 %v27
  %798 = vmatprep.subr.mxu0 0.0
  %799 = vmatpush1.msra.mxu0 %v28
  %800 = vmatprep.subr.mxu0 0.0
  %801 = vmatpush1.msra.mxu0 %v29
  %802 = vmatprep.subr.mxu0 0.0
  %803 = vmatpush1.msra.mxu0 0.0
  %804 = vmatprep.subr.mxu0 0.0
  %805 = vmatpush1.msra.mxu0 0.0
  %806 = vmatprep.subr.mxu0 0.0
  %807 = vmatpush1.msra.mxu0 0.0
  %808 = vmatprep.subr.mxu0 0.0
  %809 = vmatpush1.msra.mxu0 0.0
  %810 = vmatprep.subr.mxu0 0.0
  %811 = vmatpush1.msra.mxu0 0.0
  %812 = vmatprep.subr.mxu0 0.0
  %813 = vmatpush1.msra.mxu0 0.0
  %814 = vmatprep.subr.mxu0 0.0
  %815 = vmatpush1.msra.mxu0 0.0
  %816 = vmatprep.subr.mxu0 0.0
  %817 = vmatpush1.msra.mxu0 0.0
  %818 = vmatprep.subr.mxu0 0.0
  %819 = vmatpush1.msra.mxu0 0.0
  %820 = vmatprep.subr.mxu0 0.0
  %821 = vmatpush1.msra.mxu0 0.0
  %822 = vmatprep.subr.mxu0 0.0
  %823 = vmatpush1.msra.mxu0 0.0
  %824 = vmatprep.subr.mxu0 0.0
  %825 = vmatpush1.msra.mxu0 0.0
  %826 = vmatprep.subr.mxu0 0.0
  %827 = vmatpush1.msra.mxu0 0.0
  %828 = vmatprep.subr.mxu0 0.0
  %829 = vmatpush1.msra.mxu0 0.0
  %830 = vmatprep.subr.mxu0 0.0
  %831 = vmatpush1.msra.mxu0 0.0
  %832 = vmatprep.subr.mxu0 0.0
  %833 = vmatpush1.msra.mxu0 0.0
  %834 = vmatprep.subr.mxu0 0.0
  %835 = vmatpush1.msra.mxu0 0.0
  %836 = vmatprep.subr.mxu0 0.0
  %837 = vmatpush1.msra.mxu0 0.0
  %838 = vmatprep.subr.mxu0 0.0
  %839 = vmatpush1.msra.mxu0 0.0
  %840 = vmatprep.subr.mxu0 0.0
  %841 = vmatpush1.msra.mxu0 0.0
  %842 = vmatprep.subr.mxu0 0.0
  %843 = vmatpush1.msra.mxu0 0.0
  %844 = vmatprep.subr.mxu0 0.0
  %845 = vmatpush1.msra.mxu0 0.0
  %846 = vmatprep.subr.mxu0 0.0
  %847 = vmatpush1.msra.mxu0 0.0
  %848 = vmatprep.subr.mxu0 0.0
  %849 = vmatpush1.msra.mxu0 0.0
  %850 = vmatprep.subr.mxu0 0.0
  %851 = vmatpush1.msra.mxu0 0.0
  %852 = vmatprep.subr.mxu0 0.0
  %853 = vmatpush1.msra.mxu0 0.0
  %854 = vmatprep.subr.mxu0 0.0
  %855 = vmatpush1.msra.mxu0 0.0
  %856 = vmatprep.subr.mxu0 0.0
  %857 = vmatpush1.msra.mxu0 0.0
  %858 = vmatprep.mubr.f32.mxu0 0.0
  %859 = vmatmul.mubr.f32.gmra.mrb[0].mxu0 %v792
  %v860 = vpop.f32.mrb[0].mxu0
  %v861 = vadd.f32 0.0, %v860
  %v862 = vpop.f32.mrb[0].mxu0
  %863 = vdwg.mxu0
  %v864 = vadd.f32 %v715, %v788
  %v865 = vxor.u32 %v864, 2147483648
  %v866 = vmul.f32 %v865, 1.442695
  %v867 = vpow.pop %v866
  %v868 = vadd.f32 %v867, 1.0
  %v869 = vrcp.pop %v868
  %v870 = vmul.f32 1.0, %v869
  %v871 = vadd.f32 %v788, %v198
  %873 = vrot.lane.b32.xlu0 %v871, 64
  %v874 = vpop.permute.xlu0 %873
  %v876 = vmul.f32 %v870, %v874
  %878 = vrot.lane.b32.xlu0 %v876, 64
  %v879 = vpop.permute.xlu0 %878
  %v881 = vadd.f32 %v715, %v879
  %v882 = vtanh.pop %v881
  %v883 = vsub.f32 1.0, %v870
  %885 = vrot.lane.b32.xlu0 %v882, 96
  %v886 = vpop.permute.xlu0 %885
  %v888 = vmul.f32 %v883, %v886
  %v889 = vmul.f32 %v870, %v667
  %v890 = vadd.f32 %v888, %v889
  %892 = vrot.lane.b32.xlu0 %v861, 96
  %v893 = vpop.permute.xlu0 %892
  %v895 = vadd.f32 %v717, %v893
  %v896 = vxor.u32 %v895, 2147483648
  %v897 = vmul.f32 %v896, 1.442695
  %v898 = vpow.pop %v897
  %v899 = vadd.f32 %v898, 1.0
  %v900 = vrcp.pop %v899
  %v901 = vmul.f32 1.0, %v900
  %v902 = vadd.f32 %v718, %v893
  %v903 = vxor.u32 %v902, 2147483648
  %v904 = vmul.f32 %v903, 1.442695
  %v905 = vpow.pop %v904
  %v906 = vadd.f32 %v905, 1.0
  %v907 = vrcp.pop %v906
  %v908 = vmul.f32 1.0, %v907
  %v909 = vadd.f32 %v861, %v239
  %911 = vrot.lane.b32.xlu0 %v909, 32
  %v912 = vpop.permute.xlu0 %911
  %v914 = vmul.f32 %v901, %v912
  %916 = vrot.lane.b32.xlu0 %v914, 64
  %v917 = vpop.permute.xlu0 %916
  %v919 = vadd.f32 %v718, %v917
  %v920 = vtanh.pop %v919
  %v921 = vsub.f32 1.0, %v908
  %923 = vrot.lane.b32.xlu0 %v920, 96
  %v924 = vpop.permute.xlu0 %923
  %v926 = vmul.f32 %v921, %v924
  %v927 = vmul.f32 %v908, %v705
  %v928 = vadd.f32 %v926, %v927
  %930 = vrot.lane.b32.xlu0 %v890, 96
  %v931 = vpop.permute.xlu0 %930
  %s933 = scalar_lea.vmem %s5, 24
  %934 = vst.msk [vmem:[%s933] sm:$0xff] %vm46, %v931
  %s935 = scalar_lea.vmem %s6, 32
  %936 = vst.msk [vmem:[%s935] sm:$0xff] %vm46, %v928
  %v937 = vld [vmem:[%s716] sm:$0xff]
  %v938 = vld [vmem:[%s714] sm:$0xff]
  %v939 = vld [vmem:[%s714 + $0x8] sm:$0xff]
  %v940 = vsel %vm46, %v931, 0
  %942 = vmatprep.subr.mxu0 0.0
  %943 = vmatpush1.msra.mxu0 %v22
  %944 = vmatprep.subr.mxu0 0.0
  %945 = vmatpush1.msra.mxu0 %v23
  %946 = vmatprep.subr.mxu0 0.0
  %947 = vmatpush1.msra.mxu0 %v24
  %948 = vmatprep.subr.mxu0 0.0
  %949 = vmatpush1.msra.mxu0 %v25
  %950 = vmatprep.subr.mxu0 0.0
  %951 = vmatpush1.msra.mxu0 0.0
  %952 = vmatprep.subr.mxu0 0.0
  %953 = vmatpush1.msra.mxu0 0.0
  %954 = vmatprep.subr.mxu0 0.0
  %955 = vmatpush1.msra.mxu0 0.0
  %956 = vmatprep.subr.mxu0 0.0
  %957 = vmatpush1.msra.mxu0 0.0
  %958 = vmatprep.subr.mxu0 0.0
  %959 = vmatpush1.msra.mxu0 0.0
  %960 = vmatprep.subr.mxu0 0.0
  %961 = vmatpush1.msra.mxu0 0.0
  %962 = vmatprep.subr.mxu0 0.0
  %963 = vmatpush1.msra.mxu0 0.0
  %964 = vmatprep.subr.mxu0 0.0
  %965 = vmatpush1.msra.mxu0 0.0
  %966 = vmatprep.subr.mxu0 0.0
  %967 = vmatpush1.msra.mxu0 0.0
  %968 = vmatprep.subr.mxu0 0.0
  %969 = vmatpush1.msra.mxu0 0.0
  %970 = vmatprep.subr.mxu0 0.0
  %971 = vmatpush1.msra.mxu0 0.0
  %972 = vmatprep.subr.mxu0 0.0
  %973 = vmatpush1.msra.mxu0 0.0
  %974 = vmatprep.subr.mxu0 0.0
  %975 = vmatpush1.msra.mxu0 0.0
  %976 = vmatprep.subr.mxu0 0.0
  %977 = vmatpush1.msra.mxu0 0.0
  %978 = vmatprep.subr.mxu0 0.0
  %979 = vmatpush1.msra.mxu0 0.0
  %980 = vmatprep.subr.mxu0 0.0
  %981 = vmatpush1.msra.mxu0 0.0
  %982 = vmatprep.subr.mxu0 0.0
  %983 = vmatpush1.msra.mxu0 0.0
  %984 = vmatprep.subr.mxu0 0.0
  %985 = vmatpush1.msra.mxu0 0.0
  %986 = vmatprep.subr.mxu0 0.0
  %987 = vmatpush1.msra.mxu0 0.0
  %988 = vmatprep.subr.mxu0 0.0
  %989 = vmatpush1.msra.mxu0 0.0
  %990 = vmatprep.subr.mxu0 0.0
  %991 = vmatpush1.msra.mxu0 0.0
  %992 = vmatprep.subr.mxu0 0.0
  %993 = vmatpush1.msra.mxu0 0.0
  %994 = vmatprep.subr.mxu0 0.0
  %995 = vmatpush1.msra.mxu0 0.0
  %996 = vmatprep.subr.mxu0 0.0
  %997 = vmatpush1.msra.mxu0 0.0
  %998 = vmatprep.subr.mxu0 0.0
  %999 = vmatpush1.msra.mxu0 0.0
  %1000 = vmatprep.subr.mxu0 0.0
  %1001 = vmatpush1.msra.mxu0 0.0
  %1002 = vmatprep.subr.mxu0 0.0
  %1003 = vmatpush1.msra.mxu0 0.0
  %1004 = vmatprep.subr.mxu0 0.0
  %1005 = vmatpush1.msra.mxu0 0.0
  %1006 = vmatprep.mubr.f32.mxu0 0.0
  %1007 = vmatmul.mubr.f32.gmra.mrb[0].mxu0 %v940
  %v1008 = vpop.f32.mrb[0].mxu0
  %v1009 = vadd.f32 0.0, %v1008
  %v1010 = vpop.f32.mrb[0].mxu0
  %1011 = vdwg.mxu0
  %v1013 = vsel %vm46, %v928, 0
  %1015 = vmatprep.subr.mxu0 0.0
  %1016 = vmatpush1.msra.mxu0 %v26
  %1017 = vmatprep.subr.mxu0 0.0
  %1018 = vmatpush1.msra.mxu0 %v27
  %1019 = vmatprep.subr.mxu0 0.0
  %1020 = vmatpush1.msra.mxu0 %v28
  %1021 = vmatprep.subr.mxu0 0.0
  %1022 = vmatpush1.msra.mxu0 %v29
  %1023 = vmatprep.subr.mxu0 0.0
  %1024 = vmatpush1.msra.mxu0 0.0
  %1025 = vmatprep.subr.mxu0 0.0
  %1026 = vmatpush1.msra.mxu0 0.0
  %1027 = vmatprep.subr.mxu0 0.0
  %1028 = vmatpush1.msra.mxu0 0.0
  %1029 = vmatprep.subr.mxu0 0.0
  %1030 = vmatpush1.msra.mxu0 0.0
  %1031 = vmatprep.subr.mxu0 0.0
  %1032 = vmatpush1.msra.mxu0 0.0
  %1033 = vmatprep.subr.mxu0 0.0
  %1034 = vmatpush1.msra.mxu0 0.0
  %1035 = vmatprep.subr.mxu0 0.0
  %1036 = vmatpush1.msra.mxu0 0.0
  %1037 = vmatprep.subr.mxu0 0.0
  %1038 = vmatpush1.msra.mxu0 0.0
  %1039 = vmatprep.subr.mxu0 0.0
  %1040 = vmatpush1.msra.mxu0 0.0
  %1041 = vmatprep.subr.mxu0 0.0
  %1042 = vmatpush1.msra.mxu0 0.0
  %1043 = vmatprep.subr.mxu0 0.0
  %1044 = vmatpush1.msra.mxu0 0.0
  %1045 = vmatprep.subr.mxu0 0.0
  %1046 = vmatpush1.msra.mxu0 0.0
  %1047 = vmatprep.subr.mxu0 0.0
  %1048 = vmatpush1.msra.mxu0 0.0
  %1049 = vmatprep.subr.mxu0 0.0
  %1050 = vmatpush1.msra.mxu0 0.0
  %1051 = vmatprep.subr.mxu0 0.0
  %1052 = vmatpush1.msra.mxu0 0.0
  %1053 = vmatprep.subr.mxu0 0.0
  %1054 = vmatpush1.msra.mxu0 0.0
  %1055 = vmatprep.subr.mxu0 0.0
  %1056 = vmatpush1.msra.mxu0 0.0
  %1057 = vmatprep.subr.mxu0 0.0
  %1058 = vmatpush1.msra.mxu0 0.0
  %1059 = vmatprep.subr.mxu0 0.0
  %1060 = vmatpush1.msra.mxu0 0.0
  %1061 = vmatprep.subr.mxu0 0.0
  %1062 = vmatpush1.msra.mxu0 0.0
  %1063 = vmatprep.subr.mxu0 0.0
  %1064 = vmatpush1.msra.mxu0 0.0
  %1065 = vmatprep.subr.mxu0 0.0
  %1066 = vmatpush1.msra.mxu0 0.0
  %1067 = vmatprep.subr.mxu0 0.0
  %1068 = vmatpush1.msra.mxu0 0.0
  %1069 = vmatprep.subr.mxu0 0.0
  %1070 = vmatpush1.msra.mxu0 0.0
  %1071 = vmatprep.subr.mxu0 0.0
  %1072 = vmatpush1.msra.mxu0 0.0
  %1073 = vmatprep.subr.mxu0 0.0
  %1074 = vmatpush1.msra.mxu0 0.0
  %1075 = vmatprep.subr.mxu0 0.0
  %1076 = vmatpush1.msra.mxu0 0.0
  %1077 = vmatprep.subr.mxu0 0.0
  %1078 = vmatpush1.msra.mxu0 0.0
  %1079 = vmatprep.mubr.f32.mxu0 0.0
  %1080 = vmatmul.mubr.f32.gmra.mrb[0].mxu0 %v1013
  %v1081 = vpop.f32.mrb[0].mxu0
  %v1082 = vadd.f32 0.0, %v1081
  %v1083 = vpop.f32.mrb[0].mxu0
  %1084 = vdwg.mxu0
  %v1085 = vadd.f32 %v937, %v1009
  %v1086 = vxor.u32 %v1085, 2147483648
  %v1087 = vmul.f32 %v1086, 1.442695
  %v1088 = vpow.pop %v1087
  %v1089 = vadd.f32 %v1088, 1.0
  %v1090 = vrcp.pop %v1089
  %v1091 = vmul.f32 1.0, %v1090
  %v1092 = vadd.f32 %v1009, %v198
  %1094 = vrot.lane.b32.xlu0 %v1092, 64
  %v1095 = vpop.permute.xlu0 %1094
  %v1097 = vmul.f32 %v1091, %v1095
  %1099 = vrot.lane.b32.xlu0 %v1097, 64
  %v1100 = vpop.permute.xlu0 %1099
  %v1102 = vadd.f32 %v937, %v1100
  %v1103 = vtanh.pop %v1102
  %v1104 = vsub.f32 1.0, %v1091
  %1106 = vrot.lane.b32.xlu0 %v1103, 96
  %v1107 = vpop.permute.xlu0 %1106
  %v1109 = vmul.f32 %v1104, %v1107
  %v1110 = vmul.f32 %v1091, %v890
  %v1111 = vadd.f32 %v1109, %v1110
  %1113 = vrot.lane.b32.xlu0 %v1082, 96
  %v1114 = vpop.permute.xlu0 %1113
  %v1116 = vadd.f32 %v938, %v1114
  %v1117 = vxor.u32 %v1116, 2147483648
  %v1118 = vmul.f32 %v1117, 1.442695
  %v1119 = vpow.pop %v1118
  %v1120 = vadd.f32 %v1119, 1.0
  %v1121 = vrcp.pop %v1120
  %v1122 = vmul.f32 1.0, %v1121
  %v1123 = vadd.f32 %v939, %v1114
  %v1124 = vxor.u32 %v1123, 2147483648
  %v1125 = vmul.f32 %v1124, 1.442695
  %v1126 = vpow.pop %v1125
  %v1127 = vadd.f32 %v1126, 1.0
  %v1128 = vrcp.pop %v1127
  %v1129 = vmul.f32 1.0, %v1128
  %v1130 = vadd.f32 %v1082, %v239
  %1132 = vrot.lane.b32.xlu0 %v1130, 32
  %v1133 = vpop.permute.xlu0 %1132
  %v1135 = vmul.f32 %v1122, %v1133
  %1137 = vrot.lane.b32.xlu0 %v1135, 64
  %v1138 = vpop.permute.xlu0 %1137
  %v1140 = vadd.f32 %v939, %v1138
  %v1141 = vtanh.pop %v1140
  %v1142 = vsub.f32 1.0, %v1129
  %1144 = vrot.lane.b32.xlu0 %v1141, 96
  %v1145 = vpop.permute.xlu0 %1144
  %v1147 = vmul.f32 %v1142, %v1145
  %v1148 = vmul.f32 %v1129, %v928
  %v1149 = vadd.f32 %v1147, %v1148
  %1151 = vrot.lane.b32.xlu0 %v1111, 96
  %v1152 = vpop.permute.xlu0 %1151
  %s1154 = scalar_lea.vmem %s5, 32
  %1155 = vst.msk [vmem:[%s1154] sm:$0xff] %vm46, %v1152
  %s1156 = scalar_lea.vmem %s6, 24
  %1157 = vst.msk [vmem:[%s1156] sm:$0xff] %vm46, %v1149
  %v1158 = vld [vmem:[%s493] sm:$0xff]
  %v1159 = vld [vmem:[%s491] sm:$0xff]
  %v1160 = vld [vmem:[%s491 + $0x8] sm:$0xff]
  %v1161 = vsel %vm46, %v1152, 0
  %1163 = vmatprep.subr.mxu0 0.0
  %1164 = vmatpush1.msra.mxu0 %v22
  %1165 = vmatprep.subr.mxu0 0.0
  %1166 = vmatpush1.msra.mxu0 %v23
  %1167 = vmatprep.subr.mxu0 0.0
  %1168 = vmatpush1.msra.mxu0 %v24
  %1169 = vmatprep.subr.mxu0 0.0
  %1170 = vmatpush1.msra.mxu0 %v25
  %1171 = vmatprep.subr.mxu0 0.0
  %1172 = vmatpush1.msra.mxu0 0.0
  %1173 = vmatprep.subr.mxu0 0.0
  %1174 = vmatpush1.msra.mxu0 0.0
  %1175 = vmatprep.subr.mxu0 0.0
  %1176 = vmatpush1.msra.mxu0 0.0
  %1177 = vmatprep.subr.mxu0 0.0
  %1178 = vmatpush1.msra.mxu0 0.0
  %1179 = vmatprep.subr.mxu0 0.0
  %1180 = vmatpush1.msra.mxu0 0.0
  %1181 = vmatprep.subr.mxu0 0.0
  %1182 = vmatpush1.msra.mxu0 0.0
  %1183 = vmatprep.subr.mxu0 0.0
  %1184 = vmatpush1.msra.mxu0 0.0
  %1185 = vmatprep.subr.mxu0 0.0
  %1186 = vmatpush1.msra.mxu0 0.0
  %1187 = vmatprep.subr.mxu0 0.0
  %1188 = vmatpush1.msra.mxu0 0.0
  %1189 = vmatprep.subr.mxu0 0.0
  %1190 = vmatpush1.msra.mxu0 0.0
  %1191 = vmatprep.subr.mxu0 0.0
  %1192 = vmatpush1.msra.mxu0 0.0
  %1193 = vmatprep.subr.mxu0 0.0
  %1194 = vmatpush1.msra.mxu0 0.0
  %1195 = vmatprep.subr.mxu0 0.0
  %1196 = vmatpush1.msra.mxu0 0.0
  %1197 = vmatprep.subr.mxu0 0.0
  %1198 = vmatpush1.msra.mxu0 0.0
  %1199 = vmatprep.subr.mxu0 0.0
  %1200 = vmatpush1.msra.mxu0 0.0
  %1201 = vmatprep.subr.mxu0 0.0
  %1202 = vmatpush1.msra.mxu0 0.0
  %1203 = vmatprep.subr.mxu0 0.0
  %1204 = vmatpush1.msra.mxu0 0.0
  %1205 = vmatprep.subr.mxu0 0.0
  %1206 = vmatpush1.msra.mxu0 0.0
  %1207 = vmatprep.subr.mxu0 0.0
  %1208 = vmatpush1.msra.mxu0 0.0
  %1209 = vmatprep.subr.mxu0 0.0
  %1210 = vmatpush1.msra.mxu0 0.0
  %1211 = vmatprep.subr.mxu0 0.0
  %1212 = vmatpush1.msra.mxu0 0.0
  %1213 = vmatprep.subr.mxu0 0.0
  %1214 = vmatpush1.msra.mxu0 0.0
  %1215 = vmatprep.subr.mxu0 0.0
  %1216 = vmatpush1.msra.mxu0 0.0
  %1217 = vmatprep.subr.mxu0 0.0
  %1218 = vmatpush1.msra.mxu0 0.0
  %1219 = vmatprep.subr.mxu0 0.0
  %1220 = vmatpush1.msra.mxu0 0.0
  %1221 = vmatprep.subr.mxu0 0.0
  %1222 = vmatpush1.msra.mxu0 0.0
  %1223 = vmatprep.subr.mxu0 0.0
  %1224 = vmatpush1.msra.mxu0 0.0
  %1225 = vmatprep.subr.mxu0 0.0
  %1226 = vmatpush1.msra.mxu0 0.0
  %1227 = vmatprep.mubr.f32.mxu0 0.0
  %1228 = vmatmul.mubr.f32.gmra.mrb[0].mxu0 %v1161
  %v1229 = vpop.f32.mrb[0].mxu0
  %v1230 = vadd.f32 0.0, %v1229
  %v1231 = vpop.f32.mrb[0].mxu0
  %1232 = vdwg.mxu0
  %v1234 = vsel %vm46, %v1149, 0
  %1236 = vmatprep.subr.mxu0 0.0
  %1237 = vmatpush1.msra.mxu0 %v26
  %1238 = vmatprep.subr.mxu0 0.0
  %1239 = vmatpush1.msra.mxu0 %v27
  %1240 = vmatprep.subr.mxu0 0.0
  %1241 = vmatpush1.msra.mxu0 %v28
  %1242 = vmatprep.subr.mxu0 0.0
  %1243 = vmatpush1.msra.mxu0 %v29
  %1244 = vmatprep.subr.mxu0 0.0
  %1245 = vmatpush1.msra.mxu0 0.0
  %1246 = vmatprep.subr.mxu0 0.0
  %1247 = vmatpush1.msra.mxu0 0.0
  %1248 = vmatprep.subr.mxu0 0.0
  %1249 = vmatpush1.msra.mxu0 0.0
  %1250 = vmatprep.subr.mxu0 0.0
  %1251 = vmatpush1.msra.mxu0 0.0
  %1252 = vmatprep.subr.mxu0 0.0
  %1253 = vmatpush1.msra.mxu0 0.0
  %1254 = vmatprep.subr.mxu0 0.0
  %1255 = vmatpush1.msra.mxu0 0.0
  %1256 = vmatprep.subr.mxu0 0.0
  %1257 = vmatpush1.msra.mxu0 0.0
  %1258 = vmatprep.subr.mxu0 0.0
  %1259 = vmatpush1.msra.mxu0 0.0
  %1260 = vmatprep.subr.mxu0 0.0
  %1261 = vmatpush1.msra.mxu0 0.0
  %1262 = vmatprep.subr.mxu0 0.0
  %1263 = vmatpush1.msra.mxu0 0.0
  %1264 = vmatprep.subr.mxu0 0.0
  %1265 = vmatpush1.msra.mxu0 0.0
  %1266 = vmatprep.subr.mxu0 0.0
  %1267 = vmatpush1.msra.mxu0 0.0
  %1268 = vmatprep.subr.mxu0 0.0
  %1269 = vmatpush1.msra.mxu0 0.0
  %1270 = vmatprep.subr.mxu0 0.0
  %1271 = vmatpush1.msra.mxu0 0.0
  %1272 = vmatprep.subr.mxu0 0.0
  %1273 = vmatpush1.msra.mxu0 0.0
  %1274 = vmatprep.subr.mxu0 0.0
  %1275 = vmatpush1.msra.mxu0 0.0
  %1276 = vmatprep.subr.mxu0 0.0
  %1277 = vmatpush1.msra.mxu0 0.0
  %1278 = vmatprep.subr.mxu0 0.0
  %1279 = vmatpush1.msra.mxu0 0.0
  %1280 = vmatprep.subr.mxu0 0.0
  %1281 = vmatpush1.msra.mxu0 0.0
  %1282 = vmatprep.subr.mxu0 0.0
  %1283 = vmatpush1.msra.mxu0 0.0
  %1284 = vmatprep.subr.mxu0 0.0
  %1285 = vmatpush1.msra.mxu0 0.0
  %1286 = vmatprep.subr.mxu0 0.0
  %1287 = vmatpush1.msra.mxu0 0.0
  %1288 = vmatprep.subr.mxu0 0.0
  %1289 = vmatpush1.msra.mxu0 0.0
  %1290 = vmatprep.subr.mxu0 0.0
  %1291 = vmatpush1.msra.mxu0 0.0
  %1292 = vmatprep.subr.mxu0 0.0
  %1293 = vmatpush1.msra.mxu0 0.0
  %1294 = vmatprep.subr.mxu0 0.0
  %1295 = vmatpush1.msra.mxu0 0.0
  %1296 = vmatprep.subr.mxu0 0.0
  %1297 = vmatpush1.msra.mxu0 0.0
  %1298 = vmatprep.subr.mxu0 0.0
  %1299 = vmatpush1.msra.mxu0 0.0
  %1300 = vmatprep.mubr.f32.mxu0 0.0
  %1301 = vmatmul.mubr.f32.gmra.mrb[0].mxu0 %v1234
  %v1302 = vpop.f32.mrb[0].mxu0
  %v1303 = vadd.f32 0.0, %v1302
  %v1304 = vpop.f32.mrb[0].mxu0
  %1305 = vdwg.mxu0
  %v1306 = vadd.f32 %v1158, %v1230
  %v1307 = vxor.u32 %v1306, 2147483648
  %v1308 = vmul.f32 %v1307, 1.442695
  %v1309 = vpow.pop %v1308
  %v1310 = vadd.f32 %v1309, 1.0
  %v1311 = vrcp.pop %v1310
  %v1312 = vmul.f32 1.0, %v1311
  %v1313 = vadd.f32 %v1230, %v198
  %1315 = vrot.lane.b32.xlu0 %v1313, 64
  %v1316 = vpop.permute.xlu0 %1315
  %v1318 = vmul.f32 %v1312, %v1316
  %1320 = vrot.lane.b32.xlu0 %v1318, 64
  %v1321 = vpop.permute.xlu0 %1320
  %v1323 = vadd.f32 %v1158, %v1321
  %v1324 = vtanh.pop %v1323
  %v1325 = vsub.f32 1.0, %v1312
  %1327 = vrot.lane.b32.xlu0 %v1324, 96
  %v1328 = vpop.permute.xlu0 %1327
  %v1330 = vmul.f32 %v1325, %v1328
  %v1331 = vmul.f32 %v1312, %v1111
  %v1332 = vadd.f32 %v1330, %v1331
  %1334 = vrot.lane.b32.xlu0 %v1303, 96
  %v1335 = vpop.permute.xlu0 %1334
  %v1337 = vadd.f32 %v1159, %v1335
  %v1338 = vxor.u32 %v1337, 2147483648
  %v1339 = vmul.f32 %v1338, 1.442695
  %v1340 = vpow.pop %v1339
  %v1341 = vadd.f32 %v1340, 1.0
  %v1342 = vrcp.pop %v1341
  %v1343 = vmul.f32 1.0, %v1342
  %v1344 = vadd.f32 %v1160, %v1335
  %v1345 = vxor.u32 %v1344, 2147483648
  %v1346 = vmul.f32 %v1345, 1.442695
  %v1347 = vpow.pop %v1346
  %v1348 = vadd.f32 %v1347, 1.0
  %v1349 = vrcp.pop %v1348
  %v1350 = vmul.f32 1.0, %v1349
  %v1351 = vadd.f32 %v1303, %v239
  %1353 = vrot.lane.b32.xlu0 %v1351, 32
  %v1354 = vpop.permute.xlu0 %1353
  %v1356 = vmul.f32 %v1343, %v1354
  %1358 = vrot.lane.b32.xlu0 %v1356, 64
  %v1359 = vpop.permute.xlu0 %1358
  %v1361 = vadd.f32 %v1160, %v1359
  %v1362 = vtanh.pop %v1361
  %v1363 = vsub.f32 1.0, %v1350
  %1365 = vrot.lane.b32.xlu0 %v1362, 96
  %v1366 = vpop.permute.xlu0 %1365
  %v1368 = vmul.f32 %v1363, %v1366
  %v1369 = vmul.f32 %v1350, %v1149
  %v1370 = vadd.f32 %v1368, %v1369
  %1372 = vrot.lane.b32.xlu0 %v1332, 96
  %v1373 = vpop.permute.xlu0 %1372
  %s1375 = scalar_lea.vmem %s5, 40
  %1376 = vst.msk [vmem:[%s1375] sm:$0xff] %vm46, %v1373
  %s1377 = scalar_lea.vmem %s6, 16
  %1378 = vst.msk [vmem:[%s1377] sm:$0xff] %vm46, %v1370
  %v1379 = vld [vmem:[%s270] sm:$0xff]
  %v1380 = vld [vmem:[%s268] sm:$0xff]
  %v1381 = vld [vmem:[%s268 + $0x8] sm:$0xff]
  %v1382 = vsel %vm46, %v1373, 0
  %1384 = vmatprep.subr.mxu0 0.0
  %1385 = vmatpush1.msra.mxu0 %v22
  %1386 = vmatprep.subr.mxu0 0.0
  %1387 = vmatpush1.msra.mxu0 %v23
  %1388 = vmatprep.subr.mxu0 0.0
  %1389 = vmatpush1.msra.mxu0 %v24
  %1390 = vmatprep.subr.mxu0 0.0
  %1391 = vmatpush1.msra.mxu0 %v25
  %1392 = vmatprep.subr.mxu0 0.0
  %1393 = vmatpush1.msra.mxu0 0.0
  %1394 = vmatprep.subr.mxu0 0.0
  %1395 = vmatpush1.msra.mxu0 0.0
  %1396 = vmatprep.subr.mxu0 0.0
  %1397 = vmatpush1.msra.mxu0 0.0
  %1398 = vmatprep.subr.mxu0 0.0
  %1399 = vmatpush1.msra.mxu0 0.0
  %1400 = vmatprep.subr.mxu0 0.0
  %1401 = vmatpush1.msra.mxu0 0.0
  %1402 = vmatprep.subr.mxu0 0.0
  %1403 = vmatpush1.msra.mxu0 0.0
  %1404 = vmatprep.subr.mxu0 0.0
  %1405 = vmatpush1.msra.mxu0 0.0
  %1406 = vmatprep.subr.mxu0 0.0
  %1407 = vmatpush1.msra.mxu0 0.0
  %1408 = vmatprep.subr.mxu0 0.0
  %1409 = vmatpush1.msra.mxu0 0.0
  %1410 = vmatprep.subr.mxu0 0.0
  %1411 = vmatpush1.msra.mxu0 0.0
  %1412 = vmatprep.subr.mxu0 0.0
  %1413 = vmatpush1.msra.mxu0 0.0
  %1414 = vmatprep.subr.mxu0 0.0
  %1415 = vmatpush1.msra.mxu0 0.0
  %1416 = vmatprep.subr.mxu0 0.0
  %1417 = vmatpush1.msra.mxu0 0.0
  %1418 = vmatprep.subr.mxu0 0.0
  %1419 = vmatpush1.msra.mxu0 0.0
  %1420 = vmatprep.subr.mxu0 0.0
  %1421 = vmatpush1.msra.mxu0 0.0
  %1422 = vmatprep.subr.mxu0 0.0
  %1423 = vmatpush1.msra.mxu0 0.0
  %1424 = vmatprep.subr.mxu0 0.0
  %1425 = vmatpush1.msra.mxu0 0.0
  %1426 = vmatprep.subr.mxu0 0.0
  %1427 = vmatpush1.msra.mxu0 0.0
  %1428 = vmatprep.subr.mxu0 0.0
  %1429 = vmatpush1.msra.mxu0 0.0
  %1430 = vmatprep.subr.mxu0 0.0
  %1431 = vmatpush1.msra.mxu0 0.0
  %1432 = vmatprep.subr.mxu0 0.0
  %1433 = vmatpush1.msra.mxu0 0.0
  %1434 = vmatprep.subr.mxu0 0.0
  %1435 = vmatpush1.msra.mxu0 0.0
  %1436 = vmatprep.subr.mxu0 0.0
  %1437 = vmatpush1.msra.mxu0 0.0
  %1438 = vmatprep.subr.mxu0 0.0
  %1439 = vmatpush1.msra.mxu0 0.0
  %1440 = vmatprep.subr.mxu0 0.0
  %1441 = vmatpush1.msra.mxu0 0.0
  %1442 = vmatprep.subr.mxu0 0.0
  %1443 = vmatpush1.msra.mxu0 0.0
  %1444 = vmatprep.subr.mxu0 0.0
  %1445 = vmatpush1.msra.mxu0 0.0
  %1446 = vmatprep.subr.mxu0 0.0
  %1447 = vmatpush1.msra.mxu0 0.0
  %1448 = vmatprep.mubr.f32.mxu0 0.0
  %1449 = vmatmul.mubr.f32.gmra.mrb[0].mxu0 %v1382
  %v1450 = vpop.f32.mrb[0].mxu0
  %v1451 = vadd.f32 0.0, %v1450
  %v1452 = vpop.f32.mrb[0].mxu0
  %1453 = vdwg.mxu0
  %v1455 = vsel %vm46, %v1370, 0
  %1457 = vmatprep.subr.mxu0 0.0
  %1458 = vmatpush1.msra.mxu0 %v26
  %1459 = vmatprep.subr.mxu0 0.0
  %1460 = vmatpush1.msra.mxu0 %v27
  %1461 = vmatprep.subr.mxu0 0.0
  %1462 = vmatpush1.msra.mxu0 %v28
  %1463 = vmatprep.subr.mxu0 0.0
  %1464 = vmatpush1.msra.mxu0 %v29
  %1465 = vmatprep.subr.mxu0 0.0
  %1466 = vmatpush1.msra.mxu0 0.0
  %1467 = vmatprep.subr.mxu0 0.0
  %1468 = vmatpush1.msra.mxu0 0.0
  %1469 = vmatprep.subr.mxu0 0.0
  %1470 = vmatpush1.msra.mxu0 0.0
  %1471 = vmatprep.subr.mxu0 0.0
  %1472 = vmatpush1.msra.mxu0 0.0
  %1473 = vmatprep.subr.mxu0 0.0
  %1474 = vmatpush1.msra.mxu0 0.0
  %1475 = vmatprep.subr.mxu0 0.0
  %1476 = vmatpush1.msra.mxu0 0.0
  %1477 = vmatprep.subr.mxu0 0.0
  %1478 = vmatpush1.msra.mxu0 0.0
  %1479 = vmatprep.subr.mxu0 0.0
  %1480 = vmatpush1.msra.mxu0 0.0
  %1481 = vmatprep.subr.mxu0 0.0
  %1482 = vmatpush1.msra.mxu0 0.0
  %1483 = vmatprep.subr.mxu0 0.0
  %1484 = vmatpush1.msra.mxu0 0.0
  %1485 = vmatprep.subr.mxu0 0.0
  %1486 = vmatpush1.msra.mxu0 0.0
  %1487 = vmatprep.subr.mxu0 0.0
  %1488 = vmatpush1.msra.mxu0 0.0
  %1489 = vmatprep.subr.mxu0 0.0
  %1490 = vmatpush1.msra.mxu0 0.0
  %1491 = vmatprep.subr.mxu0 0.0
  %1492 = vmatpush1.msra.mxu0 0.0
  %1493 = vmatprep.subr.mxu0 0.0
  %1494 = vmatpush1.msra.mxu0 0.0
  %1495 = vmatprep.subr.mxu0 0.0
  %1496 = vmatpush1.msra.mxu0 0.0
  %1497 = vmatprep.subr.mxu0 0.0
  %1498 = vmatpush1.msra.mxu0 0.0
  %1499 = vmatprep.subr.mxu0 0.0
  %1500 = vmatpush1.msra.mxu0 0.0
  %1501 = vmatprep.subr.mxu0 0.0
  %1502 = vmatpush1.msra.mxu0 0.0
  %1503 = vmatprep.subr.mxu0 0.0
  %1504 = vmatpush1.msra.mxu0 0.0
  %1505 = vmatprep.subr.mxu0 0.0
  %1506 = vmatpush1.msra.mxu0 0.0
  %1507 = vmatprep.subr.mxu0 0.0
  %1508 = vmatpush1.msra.mxu0 0.0
  %1509 = vmatprep.subr.mxu0 0.0
  %1510 = vmatpush1.msra.mxu0 0.0
  %1511 = vmatprep.subr.mxu0 0.0
  %1512 = vmatpush1.msra.mxu0 0.0
  %1513 = vmatprep.subr.mxu0 0.0
  %1514 = vmatpush1.msra.mxu0 0.0
  %1515 = vmatprep.subr.mxu0 0.0
  %1516 = vmatpush1.msra.mxu0 0.0
  %1517 = vmatprep.subr.mxu0 0.0
  %1518 = vmatpush1.msra.mxu0 0.0
  %1519 = vmatprep.subr.mxu0 0.0
  %1520 = vmatpush1.msra.mxu0 0.0
  %1521 = vmatprep.mubr.f32.mxu0 0.0
  %1522 = vmatmul.mubr.f32.gmra.mrb[0].mxu0 %v1455
  %v1523 = vpop.f32.mrb[0].mxu0
  %v1524 = vadd.f32 0.0, %v1523
  %v1525 = vpop.f32.mrb[0].mxu0
  %1526 = vdwg.mxu0
  %v1527 = vadd.f32 %v1379, %v1451
  %v1528 = vxor.u32 %v1527, 2147483648
  %v1529 = vmul.f32 %v1528, 1.442695
  %v1530 = vpow.pop %v1529
  %v1531 = vadd.f32 %v1530, 1.0
  %v1532 = vrcp.pop %v1531
  %v1533 = vmul.f32 1.0, %v1532
  %v1534 = vadd.f32 %v1451, %v198
  %1536 = vrot.lane.b32.xlu0 %v1534, 64
  %v1537 = vpop.permute.xlu0 %1536
  %v1539 = vmul.f32 %v1533, %v1537
  %1541 = vrot.lane.b32.xlu0 %v1539, 64
  %v1542 = vpop.permute.xlu0 %1541
  %v1544 = vadd.f32 %v1379, %v1542
  %v1545 = vtanh.pop %v1544
  %v1546 = vsub.f32 1.0, %v1533
  %1548 = vrot.lane.b32.xlu0 %v1545, 96
  %v1549 = vpop.permute.xlu0 %1548
  %v1551 = vmul.f32 %v1546, %v1549
  %v1552 = vmul.f32 %v1533, %v1332
  %v1553 = vadd.f32 %v1551, %v1552
  %1555 = vrot.lane.b32.xlu0 %v1524, 96
  %v1556 = vpop.permute.xlu0 %1555
  %v1558 = vadd.f32 %v1380, %v1556
  %v1559 = vxor.u32 %v1558, 2147483648
  %v1560 = vmul.f32 %v1559, 1.442695
  %v1561 = vpow.pop %v1560
  %v1562 = vadd.f32 %v1561, 1.0
  %v1563 = vrcp.pop %v1562
  %v1564 = vmul.f32 1.0, %v1563
  %v1565 = vadd.f32 %v1381, %v1556
  %v1566 = vxor.u32 %v1565, 2147483648
  %v1567 = vmul.f32 %v1566, 1.442695
  %v1568 = vpow.pop %v1567
  %v1569 = vadd.f32 %v1568, 1.0
  %v1570 = vrcp.pop %v1569
  %v1571 = vmul.f32 1.0, %v1570
  %v1572 = vadd.f32 %v1524, %v239
  %1574 = vrot.lane.b32.xlu0 %v1572, 32
  %v1575 = vpop.permute.xlu0 %1574
  %v1577 = vmul.f32 %v1564, %v1575
  %1579 = vrot.lane.b32.xlu0 %v1577, 64
  %v1580 = vpop.permute.xlu0 %1579
  %v1582 = vadd.f32 %v1381, %v1580
  %v1583 = vtanh.pop %v1582
  %v1584 = vsub.f32 1.0, %v1571
  %1586 = vrot.lane.b32.xlu0 %v1583, 96
  %v1587 = vpop.permute.xlu0 %1586
  %v1589 = vmul.f32 %v1584, %v1587
  %v1590 = vmul.f32 %v1571, %v1370
  %v1591 = vadd.f32 %v1589, %v1590
  %1593 = vrot.lane.b32.xlu0 %v1553, 96
  %v1594 = vpop.permute.xlu0 %1593
  %s1596 = scalar_lea.vmem %s5, 48
  %1597 = vst.msk [vmem:[%s1596] sm:$0xff] %vm46, %v1594
  %s1598 = scalar_lea.vmem %s6, 8
  %1599 = vst.msk [vmem:[%s1598] sm:$0xff] %vm46, %v1591
  %v1600 = vld [vmem:[%s43] sm:$0xff]
  %v1601 = vld [vmem:[%s0] sm:$0xff]
  %v1602 = vld [vmem:[%s0 + $0x8] sm:$0xff]
  %v1603 = vsel %vm46, %v1594, 0
  %1605 = vmatprep.subr.mxu0 0.0
  %1606 = vmatpush1.msra.mxu0 %v22
  %1607 = vmatprep.subr.mxu0 0.0
  %1608 = vmatpush1.msra.mxu0 %v23
  %1609 = vmatprep.subr.mxu0 0.0
  %1610 = vmatpush1.msra.mxu0 %v24
  %1611 = vmatprep.subr.mxu0 0.0
  %1612 = vmatpush1.msra.mxu0 %v25
  %1613 = vmatprep.subr.mxu0 0.0
  %1614 = vmatpush1.msra.mxu0 0.0
  %1615 = vmatprep.subr.mxu0 0.0
  %1616 = vmatpush1.msra.mxu0 0.0
  %1617 = vmatprep.subr.mxu0 0.0
  %1618 = vmatpush1.msra.mxu0 0.0
  %1619 = vmatprep.subr.mxu0 0.0
  %1620 = vmatpush1.msra.mxu0 0.0
  %1621 = vmatprep.subr.mxu0 0.0
  %1622 = vmatpush1.msra.mxu0 0.0
  %1623 = vmatprep.subr.mxu0 0.0
  %1624 = vmatpush1.msra.mxu0 0.0
  %1625 = vmatprep.subr.mxu0 0.0
  %1626 = vmatpush1.msra.mxu0 0.0
  %1627 = vmatprep.subr.mxu0 0.0
  %1628 = vmatpush1.msra.mxu0 0.0
  %1629 = vmatprep.subr.mxu0 0.0
  %1630 = vmatpush1.msra.mxu0 0.0
  %1631 = vmatprep.subr.mxu0 0.0
  %1632 = vmatpush1.msra.mxu0 0.0
  %1633 = vmatprep.subr.mxu0 0.0
  %1634 = vmatpush1.msra.mxu0 0.0
  %1635 = vmatprep.subr.mxu0 0.0
  %1636 = vmatpush1.msra.mxu0 0.0
  %1637 = vmatprep.subr.mxu0 0.0
  %1638 = vmatpush1.msra.mxu0 0.0
  %1639 = vmatprep.subr.mxu0 0.0
  %1640 = vmatpush1.msra.mxu0 0.0
  %1641 = vmatprep.subr.mxu0 0.0
  %1642 = vmatpush1.msra.mxu0 0.0
  %1643 = vmatprep.subr.mxu0 0.0
  %1644 = vmatpush1.msra.mxu0 0.0
  %1645 = vmatprep.subr.mxu0 0.0
  %1646 = vmatpush1.msra.mxu0 0.0
  %1647 = vmatprep.subr.mxu0 0.0
  %1648 = vmatpush1.msra.mxu0 0.0
  %1649 = vmatprep.subr.mxu0 0.0
  %1650 = vmatpush1.msra.mxu0 0.0
  %1651 = vmatprep.subr.mxu0 0.0
  %1652 = vmatpush1.msra.mxu0 0.0
  %1653 = vmatprep.subr.mxu0 0.0
  %1654 = vmatpush1.msra.mxu0 0.0
  %1655 = vmatprep.subr.mxu0 0.0
  %1656 = vmatpush1.msra.mxu0 0.0
  %1657 = vmatprep.subr.mxu0 0.0
  %1658 = vmatpush1.msra.mxu0 0.0
  %1659 = vmatprep.subr.mxu0 0.0
  %1660 = vmatpush1.msra.mxu0 0.0
  %1661 = vmatprep.subr.mxu0 0.0
  %1662 = vmatpush1.msra.mxu0 0.0
  %1663 = vmatprep.subr.mxu0 0.0
  %1664 = vmatpush1.msra.mxu0 0.0
  %1665 = vmatprep.subr.mxu0 0.0
  %1666 = vmatpush1.msra.mxu0 0.0
  %1667 = vmatprep.subr.mxu0 0.0
  %1668 = vmatpush1.msra.mxu0 0.0
  %1669 = vmatprep.mubr.f32.mxu0 0.0
  %1670 = vmatmul.mubr.f32.gmra.mrb[0].mxu0 %v1603
  %v1671 = vpop.f32.mrb[0].mxu0
  %v1672 = vadd.f32 0.0, %v1671
  %v1673 = vpop.f32.mrb[0].mxu0
  %1674 = vdwg.mxu0
  %v1676 = vsel %vm46, %v1591, 0
  %1678 = vmatprep.subr.mxu0 0.0
  %1679 = vmatpush1.msra.mxu0 %v26
  %1680 = vmatprep.subr.mxu0 0.0
  %1681 = vmatpush1.msra.mxu0 %v27
  %1682 = vmatprep.subr.mxu0 0.0
  %1683 = vmatpush1.msra.mxu0 %v28
  %1684 = vmatprep.subr.mxu0 0.0
  %1685 = vmatpush1.msra.mxu0 %v29
  %1686 = vmatprep.subr.mxu0 0.0
  %1687 = vmatpush1.msra.mxu0 0.0
  %1688 = vmatprep.subr.mxu0 0.0
  %1689 = vmatpush1.msra.mxu0 0.0
  %1690 = vmatprep.subr.mxu0 0.0
  %1691 = vmatpush1.msra.mxu0 0.0
  %1692 = vmatprep.subr.mxu0 0.0
  %1693 = vmatpush1.msra.mxu0 0.0
  %1694 = vmatprep.subr.mxu0 0.0
  %1695 = vmatpush1.msra.mxu0 0.0
  %1696 = vmatprep.subr.mxu0 0.0
  %1697 = vmatpush1.msra.mxu0 0.0
  %1698 = vmatprep.subr.mxu0 0.0
  %1699 = vmatpush1.msra.mxu0 0.0
  %1700 = vmatprep.subr.mxu0 0.0
  %1701 = vmatpush1.msra.mxu0 0.0
  %1702 = vmatprep.subr.mxu0 0.0
  %1703 = vmatpush1.msra.mxu0 0.0
  %1704 = vmatprep.subr.mxu0 0.0
  %1705 = vmatpush1.msra.mxu0 0.0
  %1706 = vmatprep.subr.mxu0 0.0
  %1707 = vmatpush1.msra.mxu0 0.0
  %1708 = vmatprep.subr.mxu0 0.0
  %1709 = vmatpush1.msra.mxu0 0.0
  %1710 = vmatprep.subr.mxu0 0.0
  %1711 = vmatpush1.msra.mxu0 0.0
  %1712 = vmatprep.subr.mxu0 0.0
  %1713 = vmatpush1.msra.mxu0 0.0
  %1714 = vmatprep.subr.mxu0 0.0
  %1715 = vmatpush1.msra.mxu0 0.0
  %1716 = vmatprep.subr.mxu0 0.0
  %1717 = vmatpush1.msra.mxu0 0.0
  %1718 = vmatprep.subr.mxu0 0.0
  %1719 = vmatpush1.msra.mxu0 0.0
  %1720 = vmatprep.subr.mxu0 0.0
  %1721 = vmatpush1.msra.mxu0 0.0
  %1722 = vmatprep.subr.mxu0 0.0
  %1723 = vmatpush1.msra.mxu0 0.0
  %1724 = vmatprep.subr.mxu0 0.0
  %1725 = vmatpush1.msra.mxu0 0.0
  %1726 = vmatprep.subr.mxu0 0.0
  %1727 = vmatpush1.msra.mxu0 0.0
  %1728 = vmatprep.subr.mxu0 0.0
  %1729 = vmatpush1.msra.mxu0 0.0
  %1730 = vmatprep.subr.mxu0 0.0
  %1731 = vmatpush1.msra.mxu0 0.0
  %1732 = vmatprep.subr.mxu0 0.0
  %1733 = vmatpush1.msra.mxu0 0.0
  %1734 = vmatprep.subr.mxu0 0.0
  %1735 = vmatpush1.msra.mxu0 0.0
  %1736 = vmatprep.subr.mxu0 0.0
  %1737 = vmatpush1.msra.mxu0 0.0
  %1738 = vmatprep.subr.mxu0 0.0
  %1739 = vmatpush1.msra.mxu0 0.0
  %1740 = vmatprep.subr.mxu0 0.0
  %1741 = vmatpush1.msra.mxu0 0.0
  %1742 = vmatprep.mubr.f32.mxu0 0.0
  %1743 = vmatmul.mubr.f32.gmra.mrb[0].mxu0 %v1676
  %v1744 = vpop.f32.mrb[0].mxu0
  %v1745 = vadd.f32 0.0, %v1744
  %v1746 = vpop.f32.mrb[0].mxu0
  %1747 = vdwg.mxu0
  %v1748 = vadd.f32 %v1600, %v1672
  %v1749 = vxor.u32 %v1748, 2147483648
  %v1750 = vmul.f32 %v1749, 1.442695
  %v1751 = vpow.pop %v1750
  %v1752 = vadd.f32 %v1751, 1.0
  %v1753 = vrcp.pop %v1752
  %v1754 = vmul.f32 1.0, %v1753
  %v1755 = vadd.f32 %v1672, %v198
  %1757 = vrot.lane.b32.xlu0 %v1755, 64
  %v1758 = vpop.permute.xlu0 %1757
  %v1760 = vmul.f32 %v1754, %v1758
  %1762 = vrot.lane.b32.xlu0 %v1760, 64
  %v1763 = vpop.permute.xlu0 %1762
  %v1765 = vadd.f32 %v1600, %v1763
  %v1766 = vtanh.pop %v1765
  %v1767 = vsub.f32 1.0, %v1754
  %1769 = vrot.lane.b32.xlu0 %v1766, 96
  %v1770 = vpop.permute.xlu0 %1769
  %v1772 = vmul.f32 %v1767, %v1770
  %v1773 = vmul.f32 %v1754, %v1553
  %v1774 = vadd.f32 %v1772, %v1773
  %1776 = vrot.lane.b32.xlu0 %v1745, 96
  %v1777 = vpop.permute.xlu0 %1776
  %v1779 = vadd.f32 %v1601, %v1777
  %v1780 = vxor.u32 %v1779, 2147483648
  %v1781 = vmul.f32 %v1780, 1.442695
  %v1782 = vpow.pop %v1781
  %v1783 = vadd.f32 %v1782, 1.0
  %v1784 = vrcp.pop %v1783
  %v1785 = vmul.f32 1.0, %v1784
  %v1786 = vadd.f32 %v1602, %v1777
  %v1787 = vxor.u32 %v1786, 2147483648
  %v1788 = vmul.f32 %v1787, 1.442695
  %v1789 = vpow.pop %v1788
  %v1790 = vadd.f32 %v1789, 1.0
  %v1791 = vrcp.pop %v1790
  %v1792 = vmul.f32 1.0, %v1791
  %v1793 = vadd.f32 %v1745, %v239
  %1795 = vrot.lane.b32.xlu0 %v1793, 32
  %v1796 = vpop.permute.xlu0 %1795
  %v1798 = vmul.f32 %v1785, %v1796
  %1800 = vrot.lane.b32.xlu0 %v1798, 64
  %v1801 = vpop.permute.xlu0 %1800
  %v1803 = vadd.f32 %v1602, %v1801
  %v1804 = vtanh.pop %v1803
  %v1805 = vsub.f32 1.0, %v1792
  %1807 = vrot.lane.b32.xlu0 %v1804, 96
  %v1808 = vpop.permute.xlu0 %1807
  %v1810 = vmul.f32 %v1805, %v1808
  %v1811 = vmul.f32 %v1792, %v1591
  %v1812 = vadd.f32 %v1810, %v1811
  %1814 = vrot.lane.b32.xlu0 %v1774, 96
  %v1815 = vpop.permute.xlu0 %1814
  %s1817 = scalar_lea.vmem %s5, 56
  %1818 = vst.msk [vmem:[%s1817] sm:$0xff] %vm46, %v1815
  %1819 = vst.msk [vmem:[%s6] sm:$0xff] %vm46, %v1812
  // Predicated region
  $region22: #{_bigru_forward.1} parent=0 // pred_check
    _
  $region23: #{_bigru_forward.1} parent=0 // pred_check_branch
    %1821 = sbr.rel (0) target = $region25
  $region24: #{_bigru_forward.1} parent=0 // pred_region
    _
  $region25: #{_bigru_forward.1} parent=0 // pred_fallthru
    _
  // Predicated region
  $region26: #{_bigru_forward.1} parent=0 // pred_check
    _
  $region27: #{_bigru_forward.1} parent=0 // pred_check_branch
    %1823 = sbr.rel (0) target = $region29
  $region28: #{_bigru_forward.1} parent=0 // pred_region
    _
  $region29: #{_bigru_forward.1} parent=0 // pred_fallthru
    _
  // Predicated region
  $region30: #{_bigru_forward.1} parent=0 // pred_check
    _
  $region31: #{_bigru_forward.1} parent=0 // pred_check_branch
    %1825 = sbr.rel (0) target = $region33
  $region32: #{_bigru_forward.1} parent=0 // pred_region
    _
  $region33: #{_bigru_forward.1} parent=0 // pred_fallthru
    _
  // Predicated region
  $region34: #{_bigru_forward.1} parent=0 // pred_check
    _
  $region35: #{_bigru_forward.1} parent=0 // pred_check_branch
    %1827 = sbr.rel (0) target = $region37
  $region36: #{_bigru_forward.1} parent=0 // pred_region
    _
  $region37: #{_bigru_forward.1} parent=0 // pred_fallthru
    _

</llo_original>
